<compile_context>
chip_gen: v6e
topology: v6e:2x2x1
jax: 0.10.0
libtpu: 0.0.40
codegen_flags: <defaults>
</compile_context>

<pallas_src>
import functools
import math

import jax
import jax.numpy as jnp
from jax.experimental import pallas as pl
from jax.experimental.pallas import tpu as pltpu

D_MODEL = 32
N_HEADS = 4
D_HEAD = D_MODEL // N_HEADS
D_FF = 64
EPS = 1e-5  # torch.nn.LayerNorm default eps


def _round_up(x, m):
    return ((x + m - 1) // m) * m


def _layer_norm(x, gamma, beta):
    # biased variance, matching torch.nn.LayerNorm
    mean = jnp.mean(x, axis=-1, keepdims=True)
    var = jnp.mean((x - mean) ** 2, axis=-1, keepdims=True)
    return (x - mean) * jax.lax.rsqrt(var + EPS) * gamma + beta


def _encoder_layer_kernel(chunk_rows,
                          x_ref, qg_ref, kg_ref, kb_ref,
                          wqkv_ref, bqkv_ref, wo_ref, bo_ref,
                          ln1_g_ref, ln1_b_ref, ln2_g_ref, ln2_b_ref,
                          w1_ref, b1_ref, w2_ref, b2_ref,
                          o_ref):
    x = x_ref[...]                               # (rows, D) f32
    rows = x.shape[0]
    n_chunks = rows // chunk_rows

    # ---------- sublayer 0: pre-LN multi-head self-attention + residual ----------
    h = _layer_norm(x, ln1_g_ref[...], ln1_b_ref[...])
    # fused QKV projection, bf16 operands / f32 accumulation; 1/sqrt(d_head)
    # is already folded into the Q columns of wqkv (wrapper-side).
    qkv = jnp.dot(h.astype(jnp.bfloat16), wqkv_ref[...],
                  preferred_element_type=jnp.float32) + bqkv_ref[...]   # (rows, 3D) f32
    qkv16 = qkv.astype(jnp.bfloat16)

    qg = qg_ref[0]                               # (rows, 1) sequence id of each query row
    kg = kg_ref[0]                               # (1, rows) sequence id of each key row
    kb = kb_ref[0]                               # (1, rows) key-padding additive bias (0 / -1e9)

    chunk_outs = []
    for c in range(n_chunks):                    # static unroll; chunks align with sequences
        r0 = c * chunk_rows
        r1 = r0 + chunk_rows
        # Additive bias, built once per chunk (hoisted out of the head loop):
        # key-padding bias where query & key belong to the same sequence,
        # a large negative elsewhere (blocks cross-sequence attention).
        sbias = jnp.where(qg[r0:r1, :] == kg[:, r0:r1],
                          kb[:, r0:r1], -2e9)                    # (CH, CH) f32
        heads = []
        for hd in range(N_HEADS):                # static unroll (N_HEADS = 4)
            lo = hd * D_HEAD
            qh = qkv16[r0:r1, lo:lo + D_HEAD]                    # (CH, D_HEAD) bf16
            kh = qkv16[r0:r1, D_MODEL + lo:D_MODEL + lo + D_HEAD]
            vh = qkv16[r0:r1, 2 * D_MODEL + lo:2 * D_MODEL + lo + D_HEAD]
            # q @ k^T without materializing a transpose (contract last dims)
            s = jax.lax.dot_general(qh, kh, (((1,), (1,)), ((), ())),
                                    preferred_element_type=jnp.float32)
            s = s + sbias
            s = s - jnp.max(s, axis=-1, keepdims=True)
            p = jnp.exp(s)
            p = p * pl.reciprocal(jnp.sum(p, axis=-1, keepdims=True), approx=True)
            heads.append(jnp.dot(p.astype(jnp.bfloat16), vh,
                                 preferred_element_type=jnp.float32))    # (CH, D_HEAD) f32
        # lane-concat the 4 head outputs -> one K=32 Wo matmul below
        chunk_outs.append(jnp.concatenate(heads, axis=-1))               # (CH, D)
    attn = chunk_outs[0] if n_chunks == 1 else jnp.concatenate(chunk_outs, axis=0)
    attn = jnp.dot(attn.astype(jnp.bfloat16), wo_ref[...],
                   preferred_element_type=jnp.float32) + bo_ref[...]
    # TODO(synk): dropout (inverted Bernoulli) omitted — identity in eval mode.
    x1 = x + attn

    # ---------- sublayer 1: pre-LN position-wise feed-forward + residual ----------
    h2 = _layer_norm(x1, ln2_g_ref[...], ln2_b_ref[...])
    f = jnp.dot(h2.astype(jnp.bfloat16), w1_ref[...],
                preferred_element_type=jnp.float32) + b1_ref[...]
    f = jnp.maximum(f, 0.0)                      # ReLU
    f = jnp.dot(f.astype(jnp.bfloat16), w2_ref[...],
                preferred_element_type=jnp.float32) + b2_ref[...]
    o_ref[...] = x1 + f


def encoder_layer(x, mask, params, target_rows=1024):
    """x: (B, S, D_MODEL) f32, mask: (B, 1, S) (1 = attend, 0 = masked)."""
    B, S, D = x.shape
    assert D == D_MODEL

    # ---- block / chunk sizing ----
    s_g = 8 // math.gcd(S, 8)                        # rows per block must be % 8 (f32 sublanes)
    chunk_bt = max(1, min(max(1, 128 // S), B))      # sequences per ~128-row attention chunk
    unit = chunk_bt * s_g // math.gcd(chunk_bt, s_g)  # block_batch granule
    bb = max(1, target_rows // S)                    # ~target_rows rows per grid step (sweep)
    if B > 1:
        bb = min(bb, -(-B // 2))                     # >= 2 grid steps -> both v7x TCs get work
    bb = min(_round_up(bb, unit), _round_up(B, unit))
    nb = -(-B // bb)                                 # number of grid steps
    B_pad = nb * bb                                  # pad B instead of shrinking blocks
    rows = bb * S
    chunk_rows = chunk_bt * S

    mask = mask.astype(jnp.float32)
    if B_pad != B:
        x = jnp.pad(x, ((0, B_pad - B), (0, 0), (0, 0)))
        mask = jnp.pad(mask, ((0, B_pad - B), (0, 0), (0, 0)), constant_values=1.0)

    x_flat = x.astype(jnp.float32).reshape(B_pad * S, D)

    # key-padding additive bias: 0 where attended, -1e9 where masked
    key_bias = ((mask - 1.0) * 1e9).reshape(nb, 1, rows)
    # per-row sequence id (for the in-kernel block-diagonal test; avoids
    # in-kernel integer division)
    gid = (jnp.arange(B_pad * S, dtype=jnp.int32) // S).astype(jnp.float32)
    q_gid = gid.reshape(nb, rows, 1)
    k_gid = gid.reshape(nb, 1, rows)

    # Fuse Q/K/V into one (D, 3D) weight / (1, 3D) bias; fold 1/sqrt(d_head)
    # into the Q columns (parameter-side constant fold).  Weights in bf16.
    scale = 1.0 / math.sqrt(D_HEAD)
    wqkv = jnp.concatenate([params["wq"] * scale, params["wk"], params["wv"]],
                           axis=1).astype(jnp.bfloat16)
    bqkv = jnp.concatenate([params["bq"] * scale, params["bk"], params["bv"]],
                           axis=1).astype(jnp.float32)
    wo16 = params["wo"].astype(jnp.bfloat16)
    w116 = params["w1"].astype(jnp.bfloat16)
    w216 = params["w2"].astype(jnp.bfloat16)

    def replicated(shape):
        return pl.BlockSpec(shape, lambda b, _n=len(shape): (0,) * _n)

    in_specs = [
        pl.BlockSpec((rows, D), lambda b: (b, 0)),           # x (flattened rows)
        pl.BlockSpec((1, rows, 1), lambda b: (b, 0, 0)),     # q sequence ids
        pl.BlockSpec((1, 1, rows), lambda b: (b, 0, 0)),     # k sequence ids
        pl.BlockSpec((1, 1, rows), lambda b: (b, 0, 0)),     # key-padding bias
        replicated((D, 3 * D)), replicated((1, 3 * D)),      # Wqkv, bqkv
        replicated((D, D)), replicated((1, D)),              # Wo, bo
        replicated((1, D)), replicated((1, D)),              # ln1 gamma, beta
        replicated((1, D)), replicated((1, D)),              # ln2 gamma, beta
        replicated((D, D_FF)), replicated((1, D_FF)),        # W1, b1
        replicated((D_FF, D)), replicated((1, D)),           # W2, b2
    ]

    out = pl.pallas_call(
        functools.partial(_encoder_layer_kernel, chunk_rows),
        out_shape=jax.ShapeDtypeStruct((B_pad * S, D), jnp.float32),
        grid=(nb,),
        in_specs=in_specs,
        out_specs=pl.BlockSpec((rows, D), lambda b: (b, 0)),
        compiler_params=pltpu.CompilerParams(
            dimension_semantics=("parallel",)),
    )(x_flat, q_gid, k_gid, key_bias,
      wqkv, bqkv, wo16, params["bo"],
      params["ln1_g"], params["ln1_b"], params["ln2_g"], params["ln2_b"],
      w116, params["b1"], w216, params["b2"])

    return out[:B * S].reshape(B, S, D)


# ------------------------------ pure-JAX reference ------------------------------
def _reference_one(x, m, p):
    h = _layer_norm(x, p["ln1_g"], p["ln1_b"])
    q = h @ p["wq"] + p["bq"]
    k = h @ p["wk"] + p["bk"]
    v = h @ p["wv"] + p["bv"]
    scale = 1.0 / math.sqrt(D_HEAD)
    outs = []
    for hd in range(N_HEADS):
        lo = hd * D_HEAD
        s = (q[:, lo:lo + D_HEAD] @ k[:, lo:lo + D_HEAD].T) * scale
        s = jnp.where(m[None, :] > 0, s, -1e9)
        a = jax.nn.softmax(s, axis=-1)
        outs.append(a @ v[:, lo:lo + D_HEAD])
    attn = jnp.concatenate(outs, axis=-1) @ p["wo"] + p["bo"]
    x1 = x + attn
    h2 = _layer_norm(x1, p["ln2_g"], p["ln2_b"])
    f = jnp.maximum(h2 @ p["w1"] + p["b1"], 0.0) @ p["w2"] + p["b2"]
    return x1 + f


def reference(x, mask, params):
    return jax.vmap(lambda xb, mb: _reference_one(xb, mb[0], params))(x, mask)


if __name__ == "__main__":
    key = jax.random.PRNGKey(0)
    B, S = 2, 8
    keys = jax.random.split(key, 12)

    def w(k, shape, scale=0.05):
        return (scale * jax.random.normal(k, shape)).astype(jnp.float32)

    params = {
        "wq": w(keys[0], (D_MODEL, D_MODEL)), "bq": w(keys[1], (1, D_MODEL)),
        "wk": w(keys[2], (D_MODEL, D_MODEL)), "bk": w(keys[3], (1, D_MODEL)),
        "wv": w(keys[4], (D_MODEL, D_MODEL)), "bv": w(keys[5], (1, D_MODEL)),
        "wo": w(keys[6], (D_MODEL, D_MODEL)), "bo": w(keys[7], (1, D_MODEL)),
        "ln1_g": jnp.ones((1, D_MODEL), jnp.float32),
        "ln1_b": jnp.zeros((1, D_MODEL), jnp.float32),
        "ln2_g": jnp.ones((1, D_MODEL), jnp.float32),
        "ln2_b": jnp.zeros((1, D_MODEL), jnp.float32),
        "w1": w(keys[8], (D_MODEL, D_FF)), "b1": w(keys[9], (1, D_FF)),
        "w2": w(keys[10], (D_FF, D_MODEL)), "b2": w(keys[11], (1, D_MODEL)),
    }

    x = jax.random.normal(jax.random.PRNGKey(42), (B, S, D_MODEL), jnp.float32)
    mask = jnp.ones((B, 1, S), jnp.float32)
    mask = mask.at[1, 0, 6:].set(0.0)   # mask out last two positions of batch 1

    out = jax.block_until_ready(encoder_layer(x, mask, params))
    ref = jax.block_until_ready(reference(x, mask, params))

    assert out.shape == (B, S, D_MODEL)
    # tolerance accommodates bf16 matmul inputs (f32 accumulation) and the
    # EUP approximate reciprocal in the softmax; the f32 reference is exact.
    assert jnp.allclose(out, ref, atol=2e-2, rtol=2e-2), "mismatch vs reference"
    print("KERNEL_OK")
</pallas_src>

<mosaic_0001>
module attributes {stable_mosaic.version = 11 : i64} {
  func.func @_encoder_layer_kernel(%arg0: i32, %arg1: memref<16x32xf32, #tpu.memory_space<vmem>>, %arg2: memref<1x16x1xf32, #tpu.memory_space<vmem>>, %arg3: memref<1x1x16xf32, #tpu.memory_space<vmem>>, %arg4: memref<1x1x16xf32, #tpu.memory_space<vmem>>, %arg5: memref<32x96xbf16, #tpu.memory_space<vmem>>, %arg6: memref<1x96xf32, #tpu.memory_space<vmem>>, %arg7: memref<32x32xbf16, #tpu.memory_space<vmem>>, %arg8: memref<1x32xf32, #tpu.memory_space<vmem>>, %arg9: memref<1x32xf32, #tpu.memory_space<vmem>>, %arg10: memref<1x32xf32, #tpu.memory_space<vmem>>, %arg11: memref<1x32xf32, #tpu.memory_space<vmem>>, %arg12: memref<1x32xf32, #tpu.memory_space<vmem>>, %arg13: memref<32x64xbf16, #tpu.memory_space<vmem>>, %arg14: memref<1x64xf32, #tpu.memory_space<vmem>>, %arg15: memref<64x32xbf16, #tpu.memory_space<vmem>>, %arg16: memref<1x32xf32, #tpu.memory_space<vmem>>, %arg17: memref<16x32xf32, #tpu.memory_space<vmem>>) attributes {dimension_semantics = [#tpu.dimension_semantics<parallel>], iteration_bounds = array<i64: 1>, scalar_prefetch = 0 : i64, scratch_operands = 0 : i64, tpu.core_type = #tpu.core_type<tc>, window_params = [{transform_indices = @transform_0, window_bounds = array<i64: 16, 32>}, {transform_indices = @transform_1, window_bounds = array<i64: 1, 16, 1>}, {transform_indices = @transform_2, window_bounds = array<i64: 1, 1, 16>}, {transform_indices = @transform_3, window_bounds = array<i64: 1, 1, 16>}, {pipeline_mode = #tpu.pipeline_mode<synchronous>, transform_indices = @transform_4, window_bounds = array<i64: 32, 96>}, {pipeline_mode = #tpu.pipeline_mode<synchronous>, transform_indices = @transform_5, window_bounds = array<i64: 1, 96>}, {pipeline_mode = #tpu.pipeline_mode<synchronous>, transform_indices = @transform_6, window_bounds = array<i64: 32, 32>}, {pipeline_mode = #tpu.pipeline_mode<synchronous>, transform_indices = @transform_7, window_bounds = array<i64: 1, 32>}, {pipeline_mode = #tpu.pipeline_mode<synchronous>, transform_indices = @transform_8, window_bounds = array<i64: 1, 32>}, {pipeline_mode = #tpu.pipeline_mode<synchronous>, transform_indices = @transform_9, window_bounds = array<i64: 1, 32>}, {pipeline_mode = #tpu.pipeline_mode<synchronous>, transform_indices = @transform_10, window_bounds = array<i64: 1, 32>}, {pipeline_mode = #tpu.pipeline_mode<synchronous>, transform_indices = @transform_11, window_bounds = array<i64: 1, 32>}, {pipeline_mode = #tpu.pipeline_mode<synchronous>, transform_indices = @transform_12, window_bounds = array<i64: 32, 64>}, {pipeline_mode = #tpu.pipeline_mode<synchronous>, transform_indices = @transform_13, window_bounds = array<i64: 1, 64>}, {pipeline_mode = #tpu.pipeline_mode<synchronous>, transform_indices = @transform_14, window_bounds = array<i64: 64, 32>}, {pipeline_mode = #tpu.pipeline_mode<synchronous>, transform_indices = @transform_15, window_bounds = array<i64: 1, 32>}, {transform_indices = @transform_16, window_bounds = array<i64: 16, 32>}]} {
    %c0 = arith.constant 0 : index
    %c0_0 = arith.constant 0 : index
    %0 = vector.load %arg1[%c0, %c0_0] : memref<16x32xf32, #tpu.memory_space<vmem>>, vector<16x32xf32>
    %c0_1 = arith.constant 0 : index
    %c0_2 = arith.constant 0 : index
    %1 = vector.load %arg9[%c0_1, %c0_2] : memref<1x32xf32, #tpu.memory_space<vmem>>, vector<1x32xf32>
    %c0_3 = arith.constant 0 : index
    %c0_4 = arith.constant 0 : index
    %2 = vector.load %arg10[%c0_3, %c0_4] : memref<1x32xf32, #tpu.memory_space<vmem>>, vector<1x32xf32>
    %cst = arith.constant dense<0.000000e+00> : vector<16xf32>
    %3 = vector.multi_reduction <add>, %0, %cst [1] : vector<16x32xf32> to vector<16xf32>
    %4 = vector.shape_cast %3 : vector<16xf32> to vector<16x1xf32>
    %cst_5 = arith.constant 3.200000e+01 : f32
    %5 = vector.broadcast %cst_5 : f32 to vector<16x1xf32>
    %6 = arith.divf %4, %5 : vector<16x1xf32>
    %7 = vector.broadcast %6 : vector<16x1xf32> to vector<16x32xf32>
    %8 = arith.subf %0, %7 : vector<16x32xf32>
    %9 = arith.mulf %8, %8 : vector<16x32xf32>
    %cst_6 = arith.constant dense<0.000000e+00> : vector<16xf32>
    %10 = vector.multi_reduction <add>, %9, %cst_6 [1] : vector<16x32xf32> to vector<16xf32>
    %11 = vector.shape_cast %10 : vector<16xf32> to vector<16x1xf32>
    %cst_7 = arith.constant 3.200000e+01 : f32
    %12 = vector.broadcast %cst_7 : f32 to vector<16x1xf32>
    %13 = arith.divf %11, %12 : vector<16x1xf32>
    %14 = vector.broadcast %6 : vector<16x1xf32> to vector<16x32xf32>
    %15 = arith.subf %0, %14 : vector<16x32xf32>
    %cst_8 = arith.constant 9.99999974E-6 : f32
    %16 = vector.broadcast %cst_8 : f32 to vector<16x1xf32>
    %17 = arith.addf %13, %16 : vector<16x1xf32>
    %18 = math.rsqrt %17 : vector<16x1xf32>
    %19 = vector.broadcast %18 : vector<16x1xf32> to vector<16x32xf32>
    %20 = arith.mulf %15, %19 : vector<16x32xf32>
    %21 = vector.broadcast %1 : vector<1x32xf32> to vector<16x32xf32>
    %22 = arith.mulf %20, %21 : vector<16x32xf32>
    %23 = vector.broadcast %2 : vector<1x32xf32> to vector<16x32xf32>
    %24 = arith.addf %22, %23 : vector<16x32xf32>
    %25 = arith.truncf %24 : vector<16x32xf32> to vector<16x32xbf16>
    %c0_9 = arith.constant 0 : index
    %c0_10 = arith.constant 0 : index
    %26 = vector.load %arg5[%c0_9, %c0_10] : memref<32x96xbf16, #tpu.memory_space<vmem>>, vector<32x96xbf16>
    %cst_11 = arith.constant dense<0.000000e+00> : vector<16x96xf32>
    %27 = tpu.matmul %25, %26, %cst_11 {dimension_numbers = #tpu.dot_dimension_numbers<[1], [0], [0], [1], [0, 0, 1, 1], [], []>} : vector<16x32xbf16>, vector<32x96xbf16>, vector<16x96xf32> -> vector<16x96xf32>
    %c0_12 = arith.constant 0 : index
    %c0_13 = arith.constant 0 : index
    %28 = vector.load %arg6[%c0_12, %c0_13] : memref<1x96xf32, #tpu.memory_space<vmem>>, vector<1x96xf32>
    %29 = vector.broadcast %28 : vector<1x96xf32> to vector<16x96xf32>
    %30 = arith.addf %27, %29 : vector<16x96xf32>
    %31 = arith.truncf %30 : vector<16x96xf32> to vector<16x96xbf16>
    %c0_14 = arith.constant 0 : index
    %c0_15 = arith.constant 0 : index
    %c0_16 = arith.constant 0 : index
    %32 = vector.load %arg2[%c0_14, %c0_15, %c0_16] : memref<1x16x1xf32, #tpu.memory_space<vmem>>, vector<1x16x1xf32>
    %33 = vector.shape_cast %32 : vector<1x16x1xf32> to vector<16x1xf32>
    %c0_17 = arith.constant 0 : index
    %c0_18 = arith.constant 0 : index
    %c0_19 = arith.constant 0 : index
    %34 = vector.load %arg3[%c0_17, %c0_18, %c0_19] : memref<1x1x16xf32, #tpu.memory_space<vmem>>, vector<1x1x16xf32>
    %35 = vector.shape_cast %34 : vector<1x1x16xf32> to vector<1x16xf32>
    %c0_20 = arith.constant 0 : index
    %c0_21 = arith.constant 0 : index
    %c0_22 = arith.constant 0 : index
    %36 = vector.load %arg4[%c0_20, %c0_21, %c0_22] : memref<1x1x16xf32, #tpu.memory_space<vmem>>, vector<1x1x16xf32>
    %37 = vector.shape_cast %36 : vector<1x1x16xf32> to vector<1x16xf32>
    %38 = vector.broadcast %33 : vector<16x1xf32> to vector<16x16xf32>
    %39 = vector.broadcast %35 : vector<1x16xf32> to vector<16x16xf32>
    %40 = arith.cmpf oeq, %38, %39 : vector<16x16xf32>
    %cst_23 = arith.constant -2.000000e+09 : f32
    %41 = vector.shape_cast %37 : vector<1x16xf32> to vector<1x16xf32>
    %42 = vector.broadcast %41 : vector<1x16xf32> to vector<16x16xf32>
    %43 = vector.broadcast %cst_23 : f32 to vector<16x16xf32>
    %44 = arith.select %40, %42, %43 : vector<16x16xi1>, vector<16x16xf32>
    %45 = vector.extract_strided_slice %31 {offsets = [0, 0], sizes = [16, 8], strides = [1, 1]} : vector<16x96xbf16> to vector<16x8xbf16>
    %46 = vector.extract_strided_slice %31 {offsets = [0, 32], sizes = [16, 8], strides = [1, 1]} : vector<16x96xbf16> to vector<16x8xbf16>
    %47 = vector.extract_strided_slice %31 {offsets = [0, 64], sizes = [16, 8], strides = [1, 1]} : vector<16x96xbf16> to vector<16x8xbf16>
    %cst_24 = arith.constant dense<0.000000e+00> : vector<16x16xf32>
    %48 = tpu.matmul %45, %46, %cst_24 {dimension_numbers = #tpu.dot_dimension_numbers<[1], [1], [0], [0], [0, 0, 1, 0], [], []>} : vector<16x8xbf16>, vector<16x8xbf16>, vector<16x16xf32> -> vector<16x16xf32>
    %49 = arith.addf %48, %44 : vector<16x16xf32>
    %cst_25 = arith.constant dense<0xFF800000> : vector<16xf32>
    %50 = vector.multi_reduction <maximumf>, %49, %cst_25 [1] : vector<16x16xf32> to vector<16xf32>
    %51 = vector.shape_cast %50 : vector<16xf32> to vector<16x1xf32>
    %52 = vector.broadcast %51 : vector<16x1xf32> to vector<16x16xf32>
    %53 = arith.subf %49, %52 : vector<16x16xf32>
    %54 = math.exp %53 : vector<16x16xf32>
    %cst_26 = arith.constant dense<0.000000e+00> : vector<16xf32>
    %55 = vector.multi_reduction <add>, %54, %cst_26 [1] : vector<16x16xf32> to vector<16xf32>
    %56 = vector.shape_cast %55 : vector<16xf32> to vector<16x1xf32>
    %57 = tpu.reciprocal %56 {approx = true} : vector<16x1xf32> -> vector<16x1xf32>
    %58 = vector.broadcast %57 : vector<16x1xf32> to vector<16x16xf32>
    %59 = arith.mulf %54, %58 : vector<16x16xf32>
    %60 = arith.truncf %59 : vector<16x16xf32> to vector<16x16xbf16>
    %cst_27 = arith.constant dense<0.000000e+00> : vector<16x8xf32>
    %61 = tpu.matmul %60, %47, %cst_27 {dimension_numbers = #tpu.dot_dimension_numbers<[1], [0], [0], [1], [0, 0, 1, 1], [], []>} : vector<16x16xbf16>, vector<16x8xbf16>, vector<16x8xf32> -> vector<16x8xf32>
    %62 = vector.extract_strided_slice %31 {offsets = [0, 8], sizes = [16, 8], strides = [1, 1]} : vector<16x96xbf16> to vector<16x8xbf16>
    %63 = vector.extract_strided_slice %31 {offsets = [0, 40], sizes = [16, 8], strides = [1, 1]} : vector<16x96xbf16> to vector<16x8xbf16>
    %64 = vector.extract_strided_slice %31 {offsets = [0, 72], sizes = [16, 8], strides = [1, 1]} : vector<16x96xbf16> to vector<16x8xbf16>
    %cst_28 = arith.constant dense<0.000000e+00> : vector<16x16xf32>
    %65 = tpu.matmul %62, %63, %cst_28 {dimension_numbers = #tpu.dot_dimension_numbers<[1], [1], [0], [0], [0, 0, 1, 0], [], []>} : vector<16x8xbf16>, vector<16x8xbf16>, vector<16x16xf32> -> vector<16x16xf32>
    %66 = arith.addf %65, %44 : vector<16x16xf32>
    %cst_29 = arith.constant dense<0xFF800000> : vector<16xf32>
    %67 = vector.multi_reduction <maximumf>, %66, %cst_29 [1] : vector<16x16xf32> to vector<16xf32>
    %68 = vector.shape_cast %67 : vector<16xf32> to vector<16x1xf32>
    %69 = vector.broadcast %68 : vector<16x1xf32> to vector<16x16xf32>
    %70 = arith.subf %66, %69 : vector<16x16xf32>
    %71 = math.exp %70 : vector<16x16xf32>
    %cst_30 = arith.constant dense<0.000000e+00> : vector<16xf32>
    %72 = vector.multi_reduction <add>, %71, %cst_30 [1] : vector<16x16xf32> to vector<16xf32>
    %73 = vector.shape_cast %72 : vector<16xf32> to vector<16x1xf32>
    %74 = tpu.reciprocal %73 {approx = true} : vector<16x1xf32> -> vector<16x1xf32>
    %75 = vector.broadcast %74 : vector<16x1xf32> to vector<16x16xf32>
    %76 = arith.mulf %71, %75 : vector<16x16xf32>
    %77 = arith.truncf %76 : vector<16x16xf32> to vector<16x16xbf16>
    %cst_31 = arith.constant dense<0.000000e+00> : vector<16x8xf32>
    %78 = tpu.matmul %77, %64, %cst_31 {dimension_numbers = #tpu.dot_dimension_numbers<[1], [0], [0], [1], [0, 0, 1, 1], [], []>} : vector<16x16xbf16>, vector<16x8xbf16>, vector<16x8xf32> -> vector<16x8xf32>
    %79 = vector.extract_strided_slice %31 {offsets = [0, 16], sizes = [16, 8], strides = [1, 1]} : vector<16x96xbf16> to vector<16x8xbf16>
    %80 = vector.extract_strided_slice %31 {offsets = [0, 48], sizes = [16, 8], strides = [1, 1]} : vector<16x96xbf16> to vector<16x8xbf16>
    %81 = vector.extract_strided_slice %31 {offsets = [0, 80], sizes = [16, 8], strides = [1, 1]} : vector<16x96xbf16> to vector<16x8xbf16>
    %cst_32 = arith.constant dense<0.000000e+00> : vector<16x16xf32>
    %82 = tpu.matmul %79, %80, %cst_32 {dimension_numbers = #tpu.dot_dimension_numbers<[1], [1], [0], [0], [0, 0, 1, 0], [], []>} : vector<16x8xbf16>, vector<16x8xbf16>, vector<16x16xf32> -> vector<16x16xf32>
    %83 = arith.addf %82, %44 : vector<16x16xf32>
    %cst_33 = arith.constant dense<0xFF800000> : vector<16xf32>
    %84 = vector.multi_reduction <maximumf>, %83, %cst_33 [1] : vector<16x16xf32> to vector<16xf32>
    %85 = vector.shape_cast %84 : vector<16xf32> to vector<16x1xf32>
    %86 = vector.broadcast %85 : vector<16x1xf32> to vector<16x16xf32>
    %87 = arith.subf %83, %86 : vector<16x16xf32>
    %88 = math.exp %87 : vector<16x16xf32>
    %cst_34 = arith.constant dense<0.000000e+00> : vector<16xf32>
    %89 = vector.multi_reduction <add>, %88, %cst_34 [1] : vector<16x16xf32> to vector<16xf32>
    %90 = vector.shape_cast %89 : vector<16xf32> to vector<16x1xf32>
    %91 = tpu.reciprocal %90 {approx = true} : vector<16x1xf32> -> vector<16x1xf32>
    %92 = vector.broadcast %91 : vector<16x1xf32> to vector<16x16xf32>
    %93 = arith.mulf %88, %92 : vector<16x16xf32>
    %94 = arith.truncf %93 : vector<16x16xf32> to vector<16x16xbf16>
    %cst_35 = arith.constant dense<0.000000e+00> : vector<16x8xf32>
    %95 = tpu.matmul %94, %81, %cst_35 {dimension_numbers = #tpu.dot_dimension_numbers<[1], [0], [0], [1], [0, 0, 1, 1], [], []>} : vector<16x16xbf16>, vector<16x8xbf16>, vector<16x8xf32> -> vector<16x8xf32>
    %96 = vector.extract_strided_slice %31 {offsets = [0, 24], sizes = [16, 8], strides = [1, 1]} : vector<16x96xbf16> to vector<16x8xbf16>
    %97 = vector.extract_strided_slice %31 {offsets = [0, 56], sizes = [16, 8], strides = [1, 1]} : vector<16x96xbf16> to vector<16x8xbf16>
    %98 = vector.extract_strided_slice %31 {offsets = [0, 88], sizes = [16, 8], strides = [1, 1]} : vector<16x96xbf16> to vector<16x8xbf16>
    %cst_36 = arith.constant dense<0.000000e+00> : vector<16x16xf32>
    %99 = tpu.matmul %96, %97, %cst_36 {dimension_numbers = #tpu.dot_dimension_numbers<[1], [1], [0], [0], [0, 0, 1, 0], [], []>} : vector<16x8xbf16>, vector<16x8xbf16>, vector<16x16xf32> -> vector<16x16xf32>
    %100 = arith.addf %99, %44 : vector<16x16xf32>
    %cst_37 = arith.constant dense<0xFF800000> : vector<16xf32>
    %101 = vector.multi_reduction <maximumf>, %100, %cst_37 [1] : vector<16x16xf32> to vector<16xf32>
    %102 = vector.shape_cast %101 : vector<16xf32> to vector<16x1xf32>
    %103 = vector.broadcast %102 : vector<16x1xf32> to vector<16x16xf32>
    %104 = arith.subf %100, %103 : vector<16x16xf32>
    %105 = math.exp %104 : vector<16x16xf32>
    %cst_38 = arith.constant dense<0.000000e+00> : vector<16xf32>
    %106 = vector.multi_reduction <add>, %105, %cst_38 [1] : vector<16x16xf32> to vector<16xf32>
    %107 = vector.shape_cast %106 : vector<16xf32> to vector<16x1xf32>
    %108 = tpu.reciprocal %107 {approx = true} : vector<16x1xf32> -> vector<16x1xf32>
    %109 = vector.broadcast %108 : vector<16x1xf32> to vector<16x16xf32>
    %110 = arith.mulf %105, %109 : vector<16x16xf32>
    %111 = arith.truncf %110 : vector<16x16xf32> to vector<16x16xbf16>
    %cst_39 = arith.constant dense<0.000000e+00> : vector<16x8xf32>
    %112 = tpu.matmul %111, %98, %cst_39 {dimension_numbers = #tpu.dot_dimension_numbers<[1], [0], [0], [1], [0, 0, 1, 1], [], []>} : vector<16x16xbf16>, vector<16x8xbf16>, vector<16x8xf32> -> vector<16x8xf32>
    %113 = tpu.concatenate %61, %78, %95, %112 in 1 : vector<16x8xf32>, vector<16x8xf32>, vector<16x8xf32>, vector<16x8xf32> -> vector<16x32xf32>
    %114 = arith.truncf %113 : vector<16x32xf32> to vector<16x32xbf16>
    %c0_40 = arith.constant 0 : index
    %c0_41 = arith.constant 0 : index
    %115 = vector.load %arg7[%c0_40, %c0_41] : memref<32x32xbf16, #tpu.memory_space<vmem>>, vector<32x32xbf16>
    %cst_42 = arith.constant dense<0.000000e+00> : vector<16x32xf32>
    %116 = tpu.matmul %114, %115, %cst_42 {dimension_numbers = #tpu.dot_dimension_numbers<[1], [0], [0], [1], [0, 0, 1, 1], [], []>} : vector<16x32xbf16>, vector<32x32xbf16>, vector<16x32xf32> -> vector<16x32xf32>
    %c0_43 = arith.constant 0 : index
    %c0_44 = arith.constant 0 : index
    %117 = vector.load %arg8[%c0_43, %c0_44] : memref<1x32xf32, #tpu.memory_space<vmem>>, vector<1x32xf32>
    %118 = vector.broadcast %117 : vector<1x32xf32> to vector<16x32xf32>
    %119 = arith.addf %116, %118 : vector<16x32xf32>
    %120 = arith.addf %0, %119 : vector<16x32xf32>
    %c0_45 = arith.constant 0 : index
    %c0_46 = arith.constant 0 : index
    %121 = vector.load %arg11[%c0_45, %c0_46] : memref<1x32xf32, #tpu.memory_space<vmem>>, vector<1x32xf32>
    %c0_47 = arith.constant 0 : index
    %c0_48 = arith.constant 0 : index
    %122 = vector.load %arg12[%c0_47, %c0_48] : memref<1x32xf32, #tpu.memory_space<vmem>>, vector<1x32xf32>
    %cst_49 = arith.constant dense<0.000000e+00> : vector<16xf32>
    %123 = vector.multi_reduction <add>, %120, %cst_49 [1] : vector<16x32xf32> to vector<16xf32>
    %124 = vector.shape_cast %123 : vector<16xf32> to vector<16x1xf32>
    %cst_50 = arith.constant 3.200000e+01 : f32
    %125 = vector.broadcast %cst_50 : f32 to vector<16x1xf32>
    %126 = arith.divf %124, %125 : vector<16x1xf32>
    %127 = vector.broadcast %126 : vector<16x1xf32> to vector<16x32xf32>
    %128 = arith.subf %120, %127 : vector<16x32xf32>
    %129 = arith.mulf %128, %128 : vector<16x32xf32>
    %cst_51 = arith.constant dense<0.000000e+00> : vector<16xf32>
    %130 = vector.multi_reduction <add>, %129, %cst_51 [1] : vector<16x32xf32> to vector<16xf32>
    %131 = vector.shape_cast %130 : vector<16xf32> to vector<16x1xf32>
    %cst_52 = arith.constant 3.200000e+01 : f32
    %132 = vector.broadcast %cst_52 : f32 to vector<16x1xf32>
    %133 = arith.divf %131, %132 : vector<16x1xf32>
    %134 = vector.broadcast %126 : vector<16x1xf32> to vector<16x32xf32>
    %135 = arith.subf %120, %134 : vector<16x32xf32>
    %cst_53 = arith.constant 9.99999974E-6 : f32
    %136 = vector.broadcast %cst_53 : f32 to vector<16x1xf32>
    %137 = arith.addf %133, %136 : vector<16x1xf32>
    %138 = math.rsqrt %137 : vector<16x1xf32>
    %139 = vector.broadcast %138 : vector<16x1xf32> to vector<16x32xf32>
    %140 = arith.mulf %135, %139 : vector<16x32xf32>
    %141 = vector.broadcast %121 : vector<1x32xf32> to vector<16x32xf32>
    %142 = arith.mulf %140, %141 : vector<16x32xf32>
    %143 = vector.broadcast %122 : vector<1x32xf32> to vector<16x32xf32>
    %144 = arith.addf %142, %143 : vector<16x32xf32>
    %145 = arith.truncf %144 : vector<16x32xf32> to vector<16x32xbf16>
    %c0_54 = arith.constant 0 : index
    %c0_55 = arith.constant 0 : index
    %146 = vector.load %arg13[%c0_54, %c0_55] : memref<32x64xbf16, #tpu.memory_space<vmem>>, vector<32x64xbf16>
    %cst_56 = arith.constant dense<0.000000e+00> : vector<16x64xf32>
    %147 = tpu.matmul %145, %146, %cst_56 {dimension_numbers = #tpu.dot_dimension_numbers<[1], [0], [0], [1], [0, 0, 1, 1], [], []>} : vector<16x32xbf16>, vector<32x64xbf16>, vector<16x64xf32> -> vector<16x64xf32>
    %c0_57 = arith.constant 0 : index
    %c0_58 = arith.constant 0 : index
    %148 = vector.load %arg14[%c0_57, %c0_58] : memref<1x64xf32, #tpu.memory_space<vmem>>, vector<1x64xf32>
    %149 = vector.broadcast %148 : vector<1x64xf32> to vector<16x64xf32>
    %150 = arith.addf %147, %149 : vector<16x64xf32>
    %cst_59 = arith.constant 0.000000e+00 : f32
    %151 = vector.broadcast %cst_59 : f32 to vector<16x64xf32>
    %152 = arith.maximumf %150, %151 : vector<16x64xf32>
    %153 = arith.truncf %152 : vector<16x64xf32> to vector<16x64xbf16>
    %c0_60 = arith.constant 0 : index
    %c0_61 = arith.constant 0 : index
    %154 = vector.load %arg15[%c0_60, %c0_61] : memref<64x32xbf16, #tpu.memory_space<vmem>>, vector<64x32xbf16>
    %cst_62 = arith.constant dense<0.000000e+00> : vector<16x32xf32>
    %155 = tpu.matmul %153, %154, %cst_62 {dimension_numbers = #tpu.dot_dimension_numbers<[1], [0], [0], [1], [0, 0, 1, 1], [], []>} : vector<16x64xbf16>, vector<64x32xbf16>, vector<16x32xf32> -> vector<16x32xf32>
    %c0_63 = arith.constant 0 : index
    %c0_64 = arith.constant 0 : index
    %156 = vector.load %arg16[%c0_63, %c0_64] : memref<1x32xf32, #tpu.memory_space<vmem>>, vector<1x32xf32>
    %157 = vector.broadcast %156 : vector<1x32xf32> to vector<16x32xf32>
    %158 = arith.addf %155, %157 : vector<16x32xf32>
    %159 = arith.addf %120, %158 : vector<16x32xf32>
    %c0_65 = arith.constant 0 : index
    %c0_66 = arith.constant 0 : index
    %160 = vector.load %arg17[%c0_65, %c0_66] : memref<16x32xf32, #tpu.memory_space<vmem>>, vector<16x32xf32>
    tpu.vector_store %arg17[%c0_65, %c0_66], %159 {strides = array<i32>} : memref<16x32xf32, #tpu.memory_space<vmem>>, vector<16x32xf32>,
    return
  }
  func.func @transform_0(%arg0: i32) -> (i32, i32) {
    %c0_i32 = arith.constant 0 : i32
    %c0_i32_0 = arith.constant 0 : i32
    return %arg0, %c0_i32 : i32, i32
  }
  func.func @transform_1(%arg0: i32) -> (i32, i32, i32) {
    %c0_i32 = arith.constant 0 : i32
    %c0_i32_0 = arith.constant 0 : i32
    %c0_i32_1 = arith.constant 0 : i32
    return %arg0, %c0_i32, %c0_i32_0 : i32, i32, i32
  }
  func.func @transform_2(%arg0: i32) -> (i32, i32, i32) {
    %c0_i32 = arith.constant 0 : i32
    %c0_i32_0 = arith.constant 0 : i32
    %c0_i32_1 = arith.constant 0 : i32
    return %arg0, %c0_i32, %c0_i32_0 : i32, i32, i32
  }
  func.func @transform_3(%arg0: i32) -> (i32, i32, i32) {
    %c0_i32 = arith.constant 0 : i32
    %c0_i32_0 = arith.constant 0 : i32
    %c0_i32_1 = arith.constant 0 : i32
    return %arg0, %c0_i32, %c0_i32_0 : i32, i32, i32
  }
  func.func @transform_4(%arg0: i32) -> (i32, i32) {
    %c0_i32 = arith.constant 0 : i32
    %c0_i32_0 = arith.constant 0 : i32
    %c0_i32_1 = arith.constant 0 : i32
    return %c0_i32, %c0_i32_0 : i32, i32
  }
  func.func @transform_5(%arg0: i32) -> (i32, i32) {
    %c0_i32 = arith.constant 0 : i32
    %c0_i32_0 = arith.constant 0 : i32
    %c0_i32_1 = arith.constant 0 : i32
    return %c0_i32, %c0_i32_0 : i32, i32
  }
  func.func @transform_6(%arg0: i32) -> (i32, i32) {
    %c0_i32 = arith.constant 0 : i32
    %c0_i32_0 = arith.constant 0 : i32
    %c0_i32_1 = arith.constant 0 : i32
    return %c0_i32, %c0_i32_0 : i32, i32
  }
  func.func @transform_7(%arg0: i32) -> (i32, i32) {
    %c0_i32 = arith.constant 0 : i32
    %c0_i32_0 = arith.constant 0 : i32
    %c0_i32_1 = arith.constant 0 : i32
    return %c0_i32, %c0_i32_0 : i32, i32
  }
  func.func @transform_8(%arg0: i32) -> (i32, i32) {
    %c0_i32 = arith.constant 0 : i32
    %c0_i32_0 = arith.constant 0 : i32
    %c0_i32_1 = arith.constant 0 : i32
    return %c0_i32, %c0_i32_0 : i32, i32
  }
  func.func @transform_9(%arg0: i32) -> (i32, i32) {
    %c0_i32 = arith.constant 0 : i32
    %c0_i32_0 = arith.constant 0 : i32
    %c0_i32_1 = arith.constant 0 : i32
    return %c0_i32, %c0_i32_0 : i32, i32
  }
  func.func @transform_10(%arg0: i32) -> (i32, i32) {
    %c0_i32 = arith.constant 0 : i32
    %c0_i32_0 = arith.constant 0 : i32
    %c0_i32_1 = arith.constant 0 : i32
    return %c0_i32, %c0_i32_0 : i32, i32
  }
  func.func @transform_11(%arg0: i32) -> (i32, i32) {
    %c0_i32 = arith.constant 0 : i32
    %c0_i32_0 = arith.constant 0 : i32
    %c0_i32_1 = arith.constant 0 : i32
    return %c0_i32, %c0_i32_0 : i32, i32
  }
  func.func @transform_12(%arg0: i32) -> (i32, i32) {
    %c0_i32 = arith.constant 0 : i32
    %c0_i32_0 = arith.constant 0 : i32
    %c0_i32_1 = arith.constant 0 : i32
    return %c0_i32, %c0_i32_0 : i32, i32
  }
  func.func @transform_13(%arg0: i32) -> (i32, i32) {
    %c0_i32 = arith.constant 0 : i32
    %c0_i32_0 = arith.constant 0 : i32
    %c0_i32_1 = arith.constant 0 : i32
    return %c0_i32, %c0_i32_0 : i32, i32
  }
  func.func @transform_14(%arg0: i32) -> (i32, i32) {
    %c0_i32 = arith.constant 0 : i32
    %c0_i32_0 = arith.constant 0 : i32
    %c0_i32_1 = arith.constant 0 : i32
    return %c0_i32, %c0_i32_0 : i32, i32
  }
  func.func @transform_15(%arg0: i32) -> (i32, i32) {
    %c0_i32 = arith.constant 0 : i32
    %c0_i32_0 = arith.constant 0 : i32
    %c0_i32_1 = arith.constant 0 : i32
    return %c0_i32, %c0_i32_0 : i32, i32
  }
  func.func @transform_16(%arg0: i32) -> (i32, i32) {
    %c0_i32 = arith.constant 0 : i32
    %c0_i32_0 = arith.constant 0 : i32
    return %arg0, %c0_i32 : i32, i32
  }
}

</mosaic_0001>

<llo_original>
// kernel: tpu_custom_call.1
$region0: #{tpu_custom_call.1}
  #allocation0 [shape = 'u32[]', space=smem, size = 0x4, offset = 0x4, fixed_abs, tag = 'smem constant byte address 0x4 - core index']
  #allocation1 [shape = 'u32[144,128]{1,0:T(1,128)}', space=vmem, size = 0x12000, scoped, tag = 'internal scratch']
  %s0 = inlined_call_operand.vmem [shape: f32[16,32], index: 0, kind: input, shape index: {}]
  %s1 = inlined_call_operand.vmem [shape: f32[1,16,1], index: 1, kind: input, shape index: {}]
  %s2 = inlined_call_operand.vmem [shape: f32[1,1,16], index: 2, kind: input, shape index: {}]
  %s3 = inlined_call_operand.hbm [shape: f32[1,1,16], index: 3, kind: input, shape index: {}]
  %s4 = inlined_call_operand.vmem [shape: bf16[32,96], index: 4, kind: input, shape index: {}]
  %s5 = inlined_call_operand.hbm [shape: f32[1,96], index: 5, kind: input, shape index: {}]
  %s6 = inlined_call_operand.vmem [shape: bf16[32,32], index: 6, kind: input, shape index: {}]
  %s7 = inlined_call_operand.hbm [shape: f32[1,32], index: 7, kind: input, shape index: {}]
  %s8 = inlined_call_operand.hbm [shape: f32[1,32], index: 8, kind: input, shape index: {}]
  %s9 = inlined_call_operand.hbm [shape: f32[1,32], index: 9, kind: input, shape index: {}]
  %s10 = inlined_call_operand.vmem [shape: f32[1,32], index: 10, kind: input, shape index: {}]
  %s11 = inlined_call_operand.vmem [shape: f32[1,32], index: 11, kind: input, shape index: {}]
  %s12 = inlined_call_operand.vmem [shape: bf16[32,64], index: 12, kind: input, shape index: {}]
  %s13 = inlined_call_operand.vmem [shape: f32[1,64], index: 13, kind: input, shape index: {}]
  %s14 = inlined_call_operand.vmem [shape: bf16[64,32], index: 14, kind: input, shape index: {}]
  %s15 = inlined_call_operand.vmem [shape: f32[1,32], index: 15, kind: input, shape index: {}]
  %s16 = inlined_call_operand.hbm [shape: f32[16,32], index: 16, kind: output, shape index: {}]
  %s17 = sld [smem:[#allocation0]]
  $region94: #{tpu_custom_call.1} parent=0
    _
  %s19 = ssub.s32 1, %s17
  %s20 = scalar_select 0, %s19, %s17
  $region1: #{tpu_custom_call.1} parent=0
    #allocation2 [shape = 'u8[512]{0}', space=vmem, size = 0x400, scoped, tag = 'input window, operand 3, single buffered']
    #allocation3 [shape = 's32[1]{0}', space=sflag, size = 0x4, scoped, tag = 'scoped memory for tpu_custom_call.1']
    #allocation4 [shape = 's32[1]{0}', space=sflag, size = 0x4, scoped, tag = 'scoped memory for tpu_custom_call.1']
    #allocation5 [shape = 'u8[512]{0}', space=vmem, size = 0x400, scoped, tag = 'input window, operand 5, single buffered']
    #allocation6 [shape = 's32[1]{0}', space=sflag, size = 0x4, scoped, tag = 'scoped memory for tpu_custom_call.1']
    #allocation7 [shape = 'u8[512]{0}', space=vmem, size = 0x400, scoped, tag = 'input window, operand 7, single buffered']
    #allocation8 [shape = 'u8[512]{0}', space=vmem, size = 0x400, scoped, tag = 'input window, operand 8, single buffered']
    #allocation9 [shape = 's32[1]{0}', space=sflag, size = 0x4, scoped, tag = 'scoped memory for tpu_custom_call.1']
    #allocation10 [shape = 'u8[512]{0}', space=vmem, size = 0x400, scoped, tag = 'input window, operand 9, single buffered']
    #allocation11 [shape = 'u8[8192]{0}', space=vmem, size = 0x2000, scoped, tag = 'output window, operand 0, single buffered']
    %21 = vsyncpa [#allocation3], 0
    %22 = vsyncpa [#allocation6], 0
    %23 = vsyncpa [#allocation9], 0
    %24 = vsyncpa [#allocation4], 0
    // Predicated region
    $region2: #{tpu_custom_call.1} parent=1 // pred_check
      _
    $region3: #{tpu_custom_call.1} parent=1 // pred_check_branch
      %26 = sbr.rel (0) target = $region5
    $region4: #{tpu_custom_call.1} parent=1 // pred_region
      _
    $region5: #{tpu_custom_call.1} parent=1 // pred_fallthru
      _
    // Predicated region
    $region6: #{tpu_custom_call.1} parent=1 // pred_check
      _
    $region7: #{tpu_custom_call.1} parent=1 // pred_check_branch
      %28 = sbr.rel (0) target = $region9
    $region8: #{tpu_custom_call.1} parent=1 // pred_region
      _
    $region9: #{tpu_custom_call.1} parent=1 // pred_fallthru
      _
    // Predicated region
    $region10: #{tpu_custom_call.1} parent=1 // pred_check
      _
    $region11: #{tpu_custom_call.1} parent=1 // pred_check_branch
      %30 = sbr.rel (0) target = $region13
    $region12: #{tpu_custom_call.1} parent=1 // pred_region
      _
    $region13: #{tpu_custom_call.1} parent=1 // pred_fallthru
      _
    // Predicated region
    $region14: #{tpu_custom_call.1} parent=1 // pred_check
      _
    $region15: #{tpu_custom_call.1} parent=1 // pred_check_branch
      %32 = sbr.rel (0) target = $region17
    $region16: #{tpu_custom_call.1} parent=1 // pred_region
      %s34 = ssub.s32 16, 16
      %35 = vsyncadd [#allocation3], %s34
      %s37 = sshll.u32 [#allocation2], 4
      %s38 = int_to_ptr.vmem [resolvable:$true] %s37
      %40 = dma.hbm_to_vmem [thread:$0]  %s3, 16, %s38, [#allocation3]
    $region17: #{tpu_custom_call.1} parent=1 // pred_fallthru
      _
    // Predicated region
    $region18: #{tpu_custom_call.1} parent=1 // pred_check
      _
    $region19: #{tpu_custom_call.1} parent=1 // pred_check_branch
      %42 = sbr.rel (0) target = $region21
    $region20: #{tpu_custom_call.1} parent=1 // pred_region
      _
    $region21: #{tpu_custom_call.1} parent=1 // pred_fallthru
      _
    // Predicated region
    $region22: #{tpu_custom_call.1} parent=1 // pred_check
      _
    $region23: #{tpu_custom_call.1} parent=1 // pred_check_branch
      %44 = sbr.rel (0) target = $region25
    $region24: #{tpu_custom_call.1} parent=1 // pred_region
      %s46 = ssub.s32 16, 16
      %47 = vsyncadd [#allocation6], %s46
      %s49 = sshll.u32 [#allocation5], 4
      %s50 = int_to_ptr.vmem [resolvable:$true] %s49
      %52 = dma.hbm_to_vmem [thread:$0]  %s5, 16, %s50, [#allocation6]
    $region25: #{tpu_custom_call.1} parent=1 // pred_fallthru
      _
    // Predicated region
    $region26: #{tpu_custom_call.1} parent=1 // pred_check
      _
    $region27: #{tpu_custom_call.1} parent=1 // pred_check_branch
      %54 = sbr.rel (0) target = $region29
    $region28: #{tpu_custom_call.1} parent=1 // pred_region
      _
    $region29: #{tpu_custom_call.1} parent=1 // pred_fallthru
      _
    // Predicated region
    $region30: #{tpu_custom_call.1} parent=1 // pred_check
      _
    $region31: #{tpu_custom_call.1} parent=1 // pred_check_branch
      %56 = sbr.rel (0) target = $region33
    $region32: #{tpu_custom_call.1} parent=1 // pred_region
      %s58 = ssub.s32 16, 16
      %59 = vsyncadd [#allocation6], %s58
      %s61 = sshll.u32 [#allocation7], 4
      %s62 = int_to_ptr.vmem [resolvable:$true] %s61
      %64 = dma.hbm_to_vmem [thread:$0]  %s7, 16, %s62, [#allocation6]
    $region33: #{tpu_custom_call.1} parent=1 // pred_fallthru
      _
    // Predicated region
    $region34: #{tpu_custom_call.1} parent=1 // pred_check
      _
    $region35: #{tpu_custom_call.1} parent=1 // pred_check_branch
      %66 = sbr.rel (0) target = $region37
    $region36: #{tpu_custom_call.1} parent=1 // pred_region
      %s68 = ssub.s32 16, 16
      %69 = vsyncadd [#allocation9], %s68
      %s71 = sshll.u32 [#allocation8], 4
      %s72 = int_to_ptr.vmem [resolvable:$true] %s71
      %74 = dma.hbm_to_vmem [thread:$0]  %s8, 16, %s72, [#allocation9]
    $region37: #{tpu_custom_call.1} parent=1 // pred_fallthru
      _
    // Predicated region
    $region38: #{tpu_custom_call.1} parent=1 // pred_check
      _
    $region39: #{tpu_custom_call.1} parent=1 // pred_check_branch
      %76 = sbr.rel (0) target = $region41
    $region40: #{tpu_custom_call.1} parent=1 // pred_region
      %s78 = ssub.s32 16, 16
      %79 = vsyncadd [#allocation9], %s78
      %s81 = sshll.u32 [#allocation10], 4
      %s82 = int_to_ptr.vmem [resolvable:$true] %s81
      %84 = dma.hbm_to_vmem [thread:$0]  %s9, 16, %s82, [#allocation9]
    $region41: #{tpu_custom_call.1} parent=1 // pred_fallthru
      _
    // Predicated region
    $region42: #{tpu_custom_call.1} parent=1 // pred_check
      _
    $region43: #{tpu_custom_call.1} parent=1 // pred_check_branch
      %86 = sbr.rel (0) target = $region45
    $region44: #{tpu_custom_call.1} parent=1 // pred_region
      _
    $region45: #{tpu_custom_call.1} parent=1 // pred_fallthru
      _
    // Predicated region
    $region46: #{tpu_custom_call.1} parent=1 // pred_check
      _
    $region47: #{tpu_custom_call.1} parent=1 // pred_check_branch
      %88 = sbr.rel (0) target = $region49
    $region48: #{tpu_custom_call.1} parent=1 // pred_region
      _
    $region49: #{tpu_custom_call.1} parent=1 // pred_fallthru
      _
    // Predicated region
    $region50: #{tpu_custom_call.1} parent=1 // pred_check
      _
    $region51: #{tpu_custom_call.1} parent=1 // pred_check_branch
      %90 = sbr.rel (0) target = $region53
    $region52: #{tpu_custom_call.1} parent=1 // pred_region
      _
    $region53: #{tpu_custom_call.1} parent=1 // pred_fallthru
      _
    // Predicated region
    $region54: #{tpu_custom_call.1} parent=1 // pred_check
      _
    $region55: #{tpu_custom_call.1} parent=1 // pred_check_branch
      %92 = sbr.rel (0) target = $region57
    $region56: #{tpu_custom_call.1} parent=1 // pred_region
      _
    $region57: #{tpu_custom_call.1} parent=1 // pred_fallthru
      _
    // Predicated region
    $region58: #{tpu_custom_call.1} parent=1 // pred_check
      _
    $region59: #{tpu_custom_call.1} parent=1 // pred_check_branch
      %94 = sbr.rel (0) target = $region61
    $region60: #{tpu_custom_call.1} parent=1 // pred_region
      _
    $region61: #{tpu_custom_call.1} parent=1 // pred_fallthru
      _
    // Predicated region
    $region62: #{tpu_custom_call.1} parent=1 // pred_check
      _
    $region63: #{tpu_custom_call.1} parent=1 // pred_check_branch
      %96 = sbr.rel (0) target = $region65
    $region64: #{tpu_custom_call.1} parent=1 // pred_region
      _
    $region65: #{tpu_custom_call.1} parent=1 // pred_fallthru
      _
    // Predicated region
    $region66: #{tpu_custom_call.1} parent=1 // pred_check
      _
    $region67: #{tpu_custom_call.1} parent=1 // pred_check_branch
      %98 = sbr.rel (0) target = $region69
    $region68: #{tpu_custom_call.1} parent=1 // pred_region
      %99 = dma.done [#allocation3], 16
    $region69: #{tpu_custom_call.1} parent=1 // pred_fallthru
      _
    // Predicated region
    $region70: #{tpu_custom_call.1} parent=1 // pred_check
      _
    $region71: #{tpu_custom_call.1} parent=1 // pred_check_branch
      %101 = sbr.rel (0) target = $region73
    $region72: #{tpu_custom_call.1} parent=1 // pred_region
      %102 = dma.done [#allocation6], 16
    $region73: #{tpu_custom_call.1} parent=1 // pred_fallthru
      _
    // Predicated region
    $region74: #{tpu_custom_call.1} parent=1 // pred_check
      _
    $region75: #{tpu_custom_call.1} parent=1 // pred_check_branch
      %104 = sbr.rel (0) target = $region77
    $region76: #{tpu_custom_call.1} parent=1 // pred_region
      %105 = dma.done [#allocation6], 16
    $region77: #{tpu_custom_call.1} parent=1 // pred_fallthru
      _
    // Predicated region
    $region78: #{tpu_custom_call.1} parent=1 // pred_check
      _
    $region79: #{tpu_custom_call.1} parent=1 // pred_check_branch
      %107 = sbr.rel (0) target = $region81
    $region80: #{tpu_custom_call.1} parent=1 // pred_region
      %108 = dma.done [#allocation9], 16
    $region81: #{tpu_custom_call.1} parent=1 // pred_fallthru
      _
    // Predicated region
    $region82: #{tpu_custom_call.1} parent=1 // pred_check
      _
    $region83: #{tpu_custom_call.1} parent=1 // pred_check_branch
      %110 = sbr.rel (0) target = $region85
    $region84: #{tpu_custom_call.1} parent=1 // pred_region
      %111 = dma.done [#allocation9], 16
    $region85: #{tpu_custom_call.1} parent=1 // pred_fallthru
      _
    %v113 = vld [vmem:[%s0] sm:$0xff]
    %v114 = vld [vmem:[%s0 + $0x8] sm:$0xff]
    %v115 = vld [vmem:[#allocation8] sm:$0x1]
    %v116 = vld [vmem:[#allocation10] sm:$0x1]
    %vm117 = vcmask 261120
    %v118 = vsel %vm117, %v113, 0.0
    %119 = vadd.xlane.f32.xlu0 %v118
    %v120 = vpop.xlane.xlu0 %119
    %v121 = vsel %vm117, %v114, 0.0
    %122 = vadd.xlane.f32.xlu0 %v121
    %v123 = vpop.xlane.xlu0 %122
    %v124 = vrcp.pop 32.0
    %v125 = vmul.f32 %v120, %v124
    %v126 = vmul.f32 %v123, %v124
    %v127 = vsub.f32 %v113, %v125
    %v128 = vsub.f32 %v114, %v126
    %v129 = vmul.f32 %v127, %v127
    %v130 = vmul.f32 %v128, %v128
    %v131 = vsel %vm117, %v129, 0.0
    %132 = vadd.xlane.f32.xlu0 %v131
    %v133 = vpop.xlane.xlu0 %132
    %v134 = vsel %vm117, %v130, 0.0
    %135 = vadd.xlane.f32.xlu0 %v134
    %v136 = vpop.xlane.xlu0 %135
    %v137 = vmul.f32 %v133, %v124
    %v138 = vmul.f32 %v136, %v124
    %v139 = vadd.f32 %v137, 1e-05
    %v140 = vadd.f32 %v138, 1e-05
    %v141 = vrsqrt.pop %v139
    %v142 = vrsqrt.pop %v140
    %v143 = vmul.f32 %v127, %v141
    %v144 = vmul.f32 %v128, %v142
    %v146 = vlaneseq
    %v147 = vshrl.u32 %v146, 7
    %v148 = vsub.s32 0, %v147
    %v149 = vrot.slane %v115, %v148
    %v151 = vmul.f32 %v143, %v149
    %v152 = vmul.f32 %v144, %v149
    %v154 = vlaneseq
    %v155 = vshrl.u32 %v154, 7
    %v156 = vsub.s32 0, %v155
    %v157 = vrot.slane %v116, %v156
    %v159 = vadd.f32 %v151, %v157
    %v160 = vadd.f32 %v152, %v157
    %v161 = vpack.c.bf16 %v160, %v159
    %v162 = vld [vmem:[%s4] sm:$0xf]
    %v163 = vld [vmem:[%s4 + $0x4] sm:$0xf]
    %v164 = vld [vmem:[%s4 + $0x8] sm:$0xf]
    %v165 = vld [vmem:[%s4 + $0xc] sm:$0xf]
    %v166 = vld [vmem:[#allocation5] sm:$0x1]
    %v168 = vlaneseq
    %v169 = vshrl.u32 %v168, 7
    %v170 = vsub.s32 0, %v169
    %v171 = vrot.slane %v166, %v170
    %v177 = vunpack.c.l.b16 %v162
    %v178 = vunpack.c.l.b16 %v163
    %v179 = vunpack.c.l.b16 %v164
    %v180 = vunpack.c.l.b16 %v165
    %v181 = vpack.c.b16 %v178, %v177
    %v182 = vpack.c.b16 %v180, %v179
    %v186 = vsel %vm117, %v161, 0
    %188 = vmatprep.subr.bf16.mxu0 0
    %189 = vmatpush1.bf16.msra.mxu0 0
    %190 = vmatprep.subr.bf16.mxu0 0
    %191 = vmatpush1.bf16.msra.mxu0 0
    %192 = vmatprep.subr.bf16.mxu0 0
    %193 = vmatpush1.bf16.msra.mxu0 0
    %194 = vmatprep.subr.bf16.mxu0 0
    %195 = vmatpush1.bf16.msra.mxu0 0
    %196 = vmatprep.subr.bf16.mxu0 0
    %197 = vmatpush1.bf16.msra.mxu0 0
    %198 = vmatprep.subr.bf16.mxu0 0
    %199 = vmatpush1.bf16.msra.mxu0 0
    %200 = vmatprep.subr.bf16.mxu0 0
    %201 = vmatpush1.bf16.msra.mxu0 %v182
    %202 = vmatprep.subr.bf16.mxu0 0
    %203 = vmatpush1.bf16.msra.mxu0 %v181
    %204 = vmatprep.subr.bf16.mxu0 0
    %205 = vmatpush2.bf16.msra.mxu0 0
    %206 = vmatprep.subr.bf16.mxu0 0
    %207 = vmatpush2.bf16.msra.mxu0 0
    %208 = vmatprep.subr.bf16.mxu0 0
    %209 = vmatpush2.bf16.msra.mxu0 0
    %210 = vmatprep.subr.bf16.mxu0 0
    %211 = vmatpush2.bf16.msra.mxu0 0
    %212 = vmatprep.subr.bf16.mxu0 0
    %213 = vmatpush2.bf16.msra.mxu0 0
    %214 = vmatprep.subr.bf16.mxu0 0
    %215 = vmatpush2.bf16.msra.mxu0 0
    %216 = vmatprep.subr.bf16.mxu0 0
    %217 = vmatpush2.bf16.msra.mxu0 0
    %218 = vmatprep.subr.bf16.mxu0 0
    %219 = vmatpush2.bf16.msra.mxu0 0
    %220 = vmatprep.mubr.bf16.mxu0 0
    %221 = vmatmul.mubr.bf16.gmra.mxu0 %v186
    %v222 = vpop.f32.mrf.mxu0
    %v223 = vadd.f32 %v171, %v222
    %v224 = vpop.f32.mrf.mxu0
    %v225 = vpop.f32.mrf.mxu0
    %v226 = vadd.f32 %v171, %v225
    %v227 = vpop.f32.mrf.mxu0
    %228 = vdwg.mxu0
    %v229 = vpack.c.bf16 %v226, %v223
    %v230 = vld [vmem:[%s1] sm:$0xff]
    %v231 = vld [vmem:[%s1 + $0x8] sm:$0xff]
    %v232 = vld [vmem:[%s2] sm:$0x1]
    %v233 = vld [vmem:[#allocation2] sm:$0x1]
    %235 = vset.pattern.permute.xlu0 0
    %236 = vperm.xlu0 %235, %v230
    %v237 = vpop.permute.xlu0 %236
    %240 = vset.pattern.permute.xlu0 0
    %241 = vperm.xlu0 %240, %v231
    %v242 = vpop.permute.xlu0 %241
    %v245 = vlaneseq
    %v246 = vshrl.u32 %v245, 7
    %v247 = vsub.s32 0, %v246
    %v248 = vrot.slane %v232, %v247
    %vm250 = vcmp.eq.f32.partialorder %v237, %v248
    %vm251 = vcmp.eq.f32.partialorder %v242, %v248
    %v253 = vlaneseq
    %v254 = vshrl.u32 %v253, 7
    %v255 = vsub.s32 0, %v254
    %v256 = vrot.slane %v233, %v255
    %v258 = vsel %vm250, %v256, -2e+09
    %v259 = vsel %vm251, %v256, -2e+09
    %261 = vrot.lane.b32.xlu0 %v229, 96
    %v262 = vpop.permute.xlu0 %261
    %vm263 = vcmask 64512
    %v265 = vsel %vm263, %v229, 0
    %v268 = vsel %vm263, %v262, 0
    %270 = vmatprep.subr.bf16.mxu0 0
    %271 = vmatpush1.bf16.xpose.msra.mxu0 0
    %272 = vmatprep.subr.bf16.mxu0 0
    %273 = vmatpush1.bf16.xpose.msra.mxu0 0
    %274 = vmatprep.subr.bf16.mxu0 0
    %275 = vmatpush1.bf16.xpose.msra.mxu0 0
    %276 = vmatprep.subr.bf16.mxu0 0
    %277 = vmatpush1.bf16.xpose.msra.mxu0 0
    %278 = vmatprep.subr.bf16.mxu0 0
    %279 = vmatpush1.bf16.xpose.msra.mxu0 0
    %280 = vmatprep.subr.bf16.mxu0 0
    %281 = vmatpush1.bf16.xpose.msra.mxu0 0
    %282 = vmatprep.subr.bf16.mxu0 0
    %283 = vmatpush1.bf16.xpose.msra.mxu0 0
    %284 = vmatprep.subr.bf16.mxu0 0
    %285 = vmatpush1.bf16.xpose.msra.mxu0 %v268
    %286 = vmatprep.subr.bf16.mxu0 0
    %287 = vmatpush2.bf16.xpose.msra.mxu0 0
    %288 = vmatprep.subr.bf16.mxu0 0
    %289 = vmatpush2.bf16.xpose.msra.mxu0 0
    %290 = vmatprep.subr.bf16.mxu0 0
    %291 = vmatpush2.bf16.xpose.msra.mxu0 0
    %292 = vmatprep.subr.bf16.mxu0 0
    %293 = vmatpush2.bf16.xpose.msra.mxu0 0
    %294 = vmatprep.subr.bf16.mxu0 0
    %295 = vmatpush2.bf16.xpose.msra.mxu0 0
    %296 = vmatprep.subr.bf16.mxu0 0
    %297 = vmatpush2.bf16.xpose.msra.mxu0 0
    %298 = vmatprep.subr.bf16.mxu0 0
    %299 = vmatpush2.bf16.xpose.msra.mxu0 0
    %300 = vmatprep.subr.bf16.mxu0 0
    %301 = vmatpush2.bf16.xpose.msra.mxu0 0
    %302 = vmatprep.mubr.bf16.mxu0 0
    %303 = vmatmul.mubr.bf16.gmra.mxu0 %v265
    %v304 = vpop.f32.mrf.mxu0
    %v305 = vadd.f32 %v258, %v304
    %v306 = vpop.f32.mrf.mxu0
    %v307 = vpop.f32.mrf.mxu0
    %v308 = vadd.f32 %v259, %v307
    %v309 = vpop.f32.mrf.mxu0
    %310 = vdwg.mxu0
    %vm311 = vcmask 130048
    %v312 = vsel %vm311, %v305, -inf
    %313 = vmax.xlane.f32.xlu0 %v312
    %v314 = vpop.xlane.xlu0 %313
    %v315 = vsel %vm311, %v308, -inf
    %316 = vmax.xlane.f32.xlu0 %v315
    %v317 = vpop.xlane.xlu0 %316
    %v318 = vsub.f32 %v305, %v314
    %v319 = vsub.f32 %v308, %v317
    %v320 = vmul.f32 %v318, 1.442695
    %v321 = vpow.pop %v320
    %v322 = vmul.f32 %v319, 1.442695
    %v323 = vpow.pop %v322
    %v324 = vsel %vm311, %v321, 0.0
    %325 = vadd.xlane.f32.xlu0 %v324
    %v326 = vpop.xlane.xlu0 %325
    %v327 = vsel %vm311, %v323, 0.0
    %328 = vadd.xlane.f32.xlu0 %v327
    %v329 = vpop.xlane.xlu0 %328
    %v330 = vrcp.pop %v326
    %v331 = vrcp.pop %v329
    %v332 = vmul.f32 %v321, %v330
    %v333 = vmul.f32 %v323, %v331
    %v334 = vpack.c.bf16 %v333, %v332
    %335 = vrot.lane.b32.xlu0 %v229, 64
    %v336 = vpop.permute.xlu0 %335
    %v339 = vsel %vm311, %v334, 0
    %341 = vmatprep.subr.bf16.mxu0 0
    %342 = vmatpush1.bf16.msra.mxu0 0
    %343 = vmatprep.subr.bf16.mxu0 0
    %344 = vmatpush1.bf16.msra.mxu0 0
    %345 = vmatprep.subr.bf16.mxu0 0
    %346 = vmatpush1.bf16.msra.mxu0 0
    %347 = vmatprep.subr.bf16.mxu0 0
    %348 = vmatpush1.bf16.msra.mxu0 0
    %349 = vmatprep.subr.bf16.mxu0 0
    %350 = vmatpush1.bf16.msra.mxu0 0
    %351 = vmatprep.subr.bf16.mxu0 0
    %352 = vmatpush1.bf16.msra.mxu0 0
    %353 = vmatprep.subr.bf16.mxu0 0
    %354 = vmatpush1.bf16.msra.mxu0 0
    %355 = vmatprep.subr.bf16.mxu0 0
    %356 = vmatpush1.bf16.msra.mxu0 %v336
    %357 = vmatprep.subr.bf16.mxu0 0
    %358 = vmatpush2.bf16.msra.mxu0 0
    %359 = vmatprep.subr.bf16.mxu0 0
    %360 = vmatpush2.bf16.msra.mxu0 0
    %361 = vmatprep.subr.bf16.mxu0 0
    %362 = vmatpush2.bf16.msra.mxu0 0
    %363 = vmatprep.subr.bf16.mxu0 0
    %364 = vmatpush2.bf16.msra.mxu0 0
    %365 = vmatprep.subr.bf16.mxu0 0
    %366 = vmatpush2.bf16.msra.mxu0 0
    %367 = vmatprep.subr.bf16.mxu0 0
    %368 = vmatpush2.bf16.msra.mxu0 0
    %369 = vmatprep.subr.bf16.mxu0 0
    %370 = vmatpush2.bf16.msra.mxu0 0
    %371 = vmatprep.subr.bf16.mxu0 0
    %372 = vmatpush2.bf16.msra.mxu0 0
    %373 = vmatprep.mubr.bf16.mxu0 0
    %374 = vmatmul.mubr.bf16.gmra.mxu0 %v339
    %v375 = vpop.f32.mrf.mxu0
    %v376 = vadd.f32 0.0, %v375
    %v377 = vpop.f32.mrf.mxu0
    %v378 = vpop.f32.mrf.mxu0
    %v379 = vadd.f32 0.0, %v378
    %v380 = vpop.f32.mrf.mxu0
    %381 = vdwg.mxu0
    %382 = vrot.lane.b32.xlu0 %v229, 120
    %v383 = vpop.permute.xlu0 %382
    %384 = vrot.lane.b32.xlu0 %v229, 88
    %v385 = vpop.permute.xlu0 %384
    %v387 = vsel %vm263, %v383, 0
    %v390 = vsel %vm263, %v385, 0
    %392 = vmatprep.subr.bf16.mxu0 0
    %393 = vmatpush1.bf16.xpose.msra.mxu0 0
    %394 = vmatprep.subr.bf16.mxu0 0
    %395 = vmatpush1.bf16.xpose.msra.mxu0 0
    %396 = vmatprep.subr.bf16.mxu0 0
    %397 = vmatpush1.bf16.xpose.msra.mxu0 0
    %398 = vmatprep.subr.bf16.mxu0 0
    %399 = vmatpush1.bf16.xpose.msra.mxu0 0
    %400 = vmatprep.subr.bf16.mxu0 0
    %401 = vmatpush1.bf16.xpose.msra.mxu0 0
    %402 = vmatprep.subr.bf16.mxu0 0
    %403 = vmatpush1.bf16.xpose.msra.mxu0 0
    %404 = vmatprep.subr.bf16.mxu0 0
    %405 = vmatpush1.bf16.xpose.msra.mxu0 0
    %406 = vmatprep.subr.bf16.mxu0 0
    %407 = vmatpush1.bf16.xpose.msra.mxu0 %v390
    %408 = vmatprep.subr.bf16.mxu0 0
    %409 = vmatpush2.bf16.xpose.msra.mxu0 0
    %410 = vmatprep.subr.bf16.mxu0 0
    %411 = vmatpush2.bf16.xpose.msra.mxu0 0
    %412 = vmatprep.subr.bf16.mxu0 0
    %413 = vmatpush2.bf16.xpose.msra.mxu0 0
    %414 = vmatprep.subr.bf16.mxu0 0
    %415 = vmatpush2.bf16.xpose.msra.mxu0 0
    %416 = vmatprep.subr.bf16.mxu0 0
    %417 = vmatpush2.bf16.xpose.msra.mxu0 0
    %418 = vmatprep.subr.bf16.mxu0 0
    %419 = vmatpush2.bf16.xpose.msra.mxu0 0
    %420 = vmatprep.subr.bf16.mxu0 0
    %421 = vmatpush2.bf16.xpose.msra.mxu0 0
    %422 = vmatprep.subr.bf16.mxu0 0
    %423 = vmatpush2.bf16.xpose.msra.mxu0 0
    %424 = vmatprep.mubr.bf16.mxu0 0
    %425 = vmatmul.mubr.bf16.gmra.mxu0 %v387
    %v426 = vpop.f32.mrf.mxu0
    %v427 = vadd.f32 %v258, %v426
    %v428 = vpop.f32.mrf.mxu0
    %v429 = vpop.f32.mrf.mxu0
    %v430 = vadd.f32 %v259, %v429
    %v431 = vpop.f32.mrf.mxu0
    %432 = vdwg.mxu0
    %v433 = vsel %vm311, %v427, -inf
    %434 = vmax.xlane.f32.xlu0 %v433
    %v435 = vpop.xlane.xlu0 %434
    %v436 = vsel %vm311, %v430, -inf
    %437 = vmax.xlane.f32.xlu0 %v436
    %v438 = vpop.xlane.xlu0 %437
    %v439 = vsub.f32 %v427, %v435
    %v440 = vsub.f32 %v430, %v438
    %v441 = vmul.f32 %v439, 1.442695
    %v442 = vpow.pop %v441
    %v443 = vmul.f32 %v440, 1.442695
    %v444 = vpow.pop %v443
    %v445 = vsel %vm311, %v442, 0.0
    %446 = vadd.xlane.f32.xlu0 %v445
    %v447 = vpop.xlane.xlu0 %446
    %v448 = vsel %vm311, %v444, 0.0
    %449 = vadd.xlane.f32.xlu0 %v448
    %v450 = vpop.xlane.xlu0 %449
    %v451 = vrcp.pop %v447
    %v452 = vrcp.pop %v450
    %v453 = vmul.f32 %v442, %v451
    %v454 = vmul.f32 %v444, %v452
    %v455 = vpack.c.bf16 %v454, %v453
    %456 = vrot.lane.b32.xlu0 %v229, 56
    %v457 = vpop.permute.xlu0 %456
    %v460 = vsel %vm311, %v455, 0
    %462 = vmatprep.subr.bf16.mxu0 0
    %463 = vmatpush1.bf16.msra.mxu0 0
    %464 = vmatprep.subr.bf16.mxu0 0
    %465 = vmatpush1.bf16.msra.mxu0 0
    %466 = vmatprep.subr.bf16.mxu0 0
    %467 = vmatpush1.bf16.msra.mxu0 0
    %468 = vmatprep.subr.bf16.mxu0 0
    %469 = vmatpush1.bf16.msra.mxu0 0
    %470 = vmatprep.subr.bf16.mxu0 0
    %471 = vmatpush1.bf16.msra.mxu0 0
    %472 = vmatprep.subr.bf16.mxu0 0
    %473 = vmatpush1.bf16.msra.mxu0 0
    %474 = vmatprep.subr.bf16.mxu0 0
    %475 = vmatpush1.bf16.msra.mxu0 0
    %476 = vmatprep.subr.bf16.mxu0 0
    %477 = vmatpush1.bf16.msra.mxu0 %v457
    %478 = vmatprep.subr.bf16.mxu0 0
    %479 = vmatpush2.bf16.msra.mxu0 0
    %480 = vmatprep.subr.bf16.mxu0 0
    %481 = vmatpush2.bf16.msra.mxu0 0
    %482 = vmatprep.subr.bf16.mxu0 0
    %483 = vmatpush2.bf16.msra.mxu0 0
    %484 = vmatprep.subr.bf16.mxu0 0
    %485 = vmatpush2.bf16.msra.mxu0 0
    %486 = vmatprep.subr.bf16.mxu0 0
    %487 = vmatpush2.bf16.msra.mxu0 0
    %488 = vmatprep.subr.bf16.mxu0 0
    %489 = vmatpush2.bf16.msra.mxu0 0
    %490 = vmatprep.subr.bf16.mxu0 0
    %491 = vmatpush2.bf16.msra.mxu0 0
    %492 = vmatprep.subr.bf16.mxu0 0
    %493 = vmatpush2.bf16.msra.mxu0 0
    %494 = vmatprep.mubr.bf16.mxu0 0
    %495 = vmatmul.mubr.bf16.gmra.mxu0 %v460
    %v496 = vpop.f32.mrf.mxu0
    %v497 = vadd.f32 0.0, %v496
    %v498 = vpop.f32.mrf.mxu0
    %v499 = vpop.f32.mrf.mxu0
    %v500 = vadd.f32 0.0, %v499
    %v501 = vpop.f32.mrf.mxu0
    %502 = vdwg.mxu0
    %503 = vrot.lane.b32.xlu0 %v229, 112
    %v504 = vpop.permute.xlu0 %503
    %505 = vrot.lane.b32.xlu0 %v229, 80
    %v506 = vpop.permute.xlu0 %505
    %v508 = vsel %vm263, %v504, 0
    %v511 = vsel %vm263, %v506, 0
    %513 = vmatprep.subr.bf16.mxu0 0
    %514 = vmatpush1.bf16.xpose.msra.mxu0 0
    %515 = vmatprep.subr.bf16.mxu0 0
    %516 = vmatpush1.bf16.xpose.msra.mxu0 0
    %517 = vmatprep.subr.bf16.mxu0 0
    %518 = vmatpush1.bf16.xpose.msra.mxu0 0
    %519 = vmatprep.subr.bf16.mxu0 0
    %520 = vmatpush1.bf16.xpose.msra.mxu0 0
    %521 = vmatprep.subr.bf16.mxu0 0
    %522 = vmatpush1.bf16.xpose.msra.mxu0 0
    %523 = vmatprep.subr.bf16.mxu0 0
    %524 = vmatpush1.bf16.xpose.msra.mxu0 0
    %525 = vmatprep.subr.bf16.mxu0 0
    %526 = vmatpush1.bf16.xpose.msra.mxu0 0
    %527 = vmatprep.subr.bf16.mxu0 0
    %528 = vmatpush1.bf16.xpose.msra.mxu0 %v511
    %529 = vmatprep.subr.bf16.mxu0 0
    %530 = vmatpush2.bf16.xpose.msra.mxu0 0
    %531 = vmatprep.subr.bf16.mxu0 0
    %532 = vmatpush2.bf16.xpose.msra.mxu0 0
    %533 = vmatprep.subr.bf16.mxu0 0
    %534 = vmatpush2.bf16.xpose.msra.mxu0 0
    %535 = vmatprep.subr.bf16.mxu0 0
    %536 = vmatpush2.bf16.xpose.msra.mxu0 0
    %537 = vmatprep.subr.bf16.mxu0 0
    %538 = vmatpush2.bf16.xpose.msra.mxu0 0
    %539 = vmatprep.subr.bf16.mxu0 0
    %540 = vmatpush2.bf16.xpose.msra.mxu0 0
    %541 = vmatprep.subr.bf16.mxu0 0
    %542 = vmatpush2.bf16.xpose.msra.mxu0 0
    %543 = vmatprep.subr.bf16.mxu0 0
    %544 = vmatpush2.bf16.xpose.msra.mxu0 0
    %545 = vmatprep.mubr.bf16.mxu0 0
    %546 = vmatmul.mubr.bf16.gmra.mxu0 %v508
    %v547 = vpop.f32.mrf.mxu0
    %v548 = vadd.f32 %v258, %v547
    %v549 = vpop.f32.mrf.mxu0
    %v550 = vpop.f32.mrf.mxu0
    %v551 = vadd.f32 %v259, %v550
    %v552 = vpop.f32.mrf.mxu0
    %553 = vdwg.mxu0
    %v554 = vsel %vm311, %v548, -inf
    %555 = vmax.xlane.f32.xlu0 %v554
    %v556 = vpop.xlane.xlu0 %555
    %v557 = vsel %vm311, %v551, -inf
    %558 = vmax.xlane.f32.xlu0 %v557
    %v559 = vpop.xlane.xlu0 %558
    %v560 = vsub.f32 %v548, %v556
    %v561 = vsub.f32 %v551, %v559
    %v562 = vmul.f32 %v560, 1.442695
    %v563 = vpow.pop %v562
    %v564 = vmul.f32 %v561, 1.442695
    %v565 = vpow.pop %v564
    %v566 = vsel %vm311, %v563, 0.0
    %567 = vadd.xlane.f32.xlu0 %v566
    %v568 = vpop.xlane.xlu0 %567
    %v569 = vsel %vm311, %v565, 0.0
    %570 = vadd.xlane.f32.xlu0 %v569
    %v571 = vpop.xlane.xlu0 %570
    %v572 = vrcp.pop %v568
    %v573 = vrcp.pop %v571
    %v574 = vmul.f32 %v563, %v572
    %v575 = vmul.f32 %v565, %v573
    %v576 = vpack.c.bf16 %v575, %v574
    %577 = vrot.lane.b32.xlu0 %v229, 48
    %v578 = vpop.permute.xlu0 %577
    %v581 = vsel %vm311, %v576, 0
    %583 = vmatprep.subr.bf16.mxu0 0
    %584 = vmatpush1.bf16.msra.mxu0 0
    %585 = vmatprep.subr.bf16.mxu0 0
    %586 = vmatpush1.bf16.msra.mxu0 0
    %587 = vmatprep.subr.bf16.mxu0 0
    %588 = vmatpush1.bf16.msra.mxu0 0
    %589 = vmatprep.subr.bf16.mxu0 0
    %590 = vmatpush1.bf16.msra.mxu0 0
    %591 = vmatprep.subr.bf16.mxu0 0
    %592 = vmatpush1.bf16.msra.mxu0 0
    %593 = vmatprep.subr.bf16.mxu0 0
    %594 = vmatpush1.bf16.msra.mxu0 0
    %595 = vmatprep.subr.bf16.mxu0 0
    %596 = vmatpush1.bf16.msra.mxu0 0
    %597 = vmatprep.subr.bf16.mxu0 0
    %598 = vmatpush1.bf16.msra.mxu0 %v578
    %599 = vmatprep.subr.bf16.mxu0 0
    %600 = vmatpush2.bf16.msra.mxu0 0
    %601 = vmatprep.subr.bf16.mxu0 0
    %602 = vmatpush2.bf16.msra.mxu0 0
    %603 = vmatprep.subr.bf16.mxu0 0
    %604 = vmatpush2.bf16.msra.mxu0 0
    %605 = vmatprep.subr.bf16.mxu0 0
    %606 = vmatpush2.bf16.msra.mxu0 0
    %607 = vmatprep.subr.bf16.mxu0 0
    %608 = vmatpush2.bf16.msra.mxu0 0
    %609 = vmatprep.subr.bf16.mxu0 0
    %610 = vmatpush2.bf16.msra.mxu0 0
    %611 = vmatprep.subr.bf16.mxu0 0
    %612 = vmatpush2.bf16.msra.mxu0 0
    %613 = vmatprep.subr.bf16.mxu0 0
    %614 = vmatpush2.bf16.msra.mxu0 0
    %615 = vmatprep.mubr.bf16.mxu0 0
    %616 = vmatmul.mubr.bf16.gmra.mxu0 %v581
    %v617 = vpop.f32.mrf.mxu0
    %v618 = vadd.f32 0.0, %v617
    %v619 = vpop.f32.mrf.mxu0
    %v620 = vpop.f32.mrf.mxu0
    %v621 = vadd.f32 0.0, %v620
    %v622 = vpop.f32.mrf.mxu0
    %623 = vdwg.mxu0
    %624 = vrot.lane.b32.xlu0 %v229, 104
    %v625 = vpop.permute.xlu0 %624
    %626 = vrot.lane.b32.xlu0 %v229, 72
    %v627 = vpop.permute.xlu0 %626
    %v629 = vsel %vm263, %v625, 0
    %v632 = vsel %vm263, %v627, 0
    %634 = vmatprep.subr.bf16.mxu0 0
    %635 = vmatpush1.bf16.xpose.msra.mxu0 0
    %636 = vmatprep.subr.bf16.mxu0 0
    %637 = vmatpush1.bf16.xpose.msra.mxu0 0
    %638 = vmatprep.subr.bf16.mxu0 0
    %639 = vmatpush1.bf16.xpose.msra.mxu0 0
    %640 = vmatprep.subr.bf16.mxu0 0
    %641 = vmatpush1.bf16.xpose.msra.mxu0 0
    %642 = vmatprep.subr.bf16.mxu0 0
    %643 = vmatpush1.bf16.xpose.msra.mxu0 0
    %644 = vmatprep.subr.bf16.mxu0 0
    %645 = vmatpush1.bf16.xpose.msra.mxu0 0
    %646 = vmatprep.subr.bf16.mxu0 0
    %647 = vmatpush1.bf16.xpose.msra.mxu0 0
    %648 = vmatprep.subr.bf16.mxu0 0
    %649 = vmatpush1.bf16.xpose.msra.mxu0 %v632
    %650 = vmatprep.subr.bf16.mxu0 0
    %651 = vmatpush2.bf16.xpose.msra.mxu0 0
    %652 = vmatprep.subr.bf16.mxu0 0
    %653 = vmatpush2.bf16.xpose.msra.mxu0 0
    %654 = vmatprep.subr.bf16.mxu0 0
    %655 = vmatpush2.bf16.xpose.msra.mxu0 0
    %656 = vmatprep.subr.bf16.mxu0 0
    %657 = vmatpush2.bf16.xpose.msra.mxu0 0
    %658 = vmatprep.subr.bf16.mxu0 0
    %659 = vmatpush2.bf16.xpose.msra.mxu0 0
    %660 = vmatprep.subr.bf16.mxu0 0
    %661 = vmatpush2.bf16.xpose.msra.mxu0 0
    %662 = vmatprep.subr.bf16.mxu0 0
    %663 = vmatpush2.bf16.xpose.msra.mxu0 0
    %664 = vmatprep.subr.bf16.mxu0 0
    %665 = vmatpush2.bf16.xpose.msra.mxu0 0
    %666 = vmatprep.mubr.bf16.mxu0 0
    %667 = vmatmul.mubr.bf16.gmra.mxu0 %v629
    %v668 = vpop.f32.mrf.mxu0
    %v669 = vadd.f32 %v258, %v668
    %v670 = vpop.f32.mrf.mxu0
    %v671 = vpop.f32.mrf.mxu0
    %v672 = vadd.f32 %v259, %v671
    %v673 = vpop.f32.mrf.mxu0
    %674 = vdwg.mxu0
    %v675 = vsel %vm311, %v669, -inf
    %676 = vmax.xlane.f32.xlu0 %v675
    %v677 = vpop.xlane.xlu0 %676
    %v678 = vsel %vm311, %v672, -inf
    %679 = vmax.xlane.f32.xlu0 %v678
    %v680 = vpop.xlane.xlu0 %679
    %v681 = vsub.f32 %v669, %v677
    %v682 = vsub.f32 %v672, %v680
    %v683 = vmul.f32 %v681, 1.442695
    %v684 = vpow.pop %v683
    %v685 = vmul.f32 %v682, 1.442695
    %v686 = vpow.pop %v685
    %v687 = vsel %vm311, %v684, 0.0
    %688 = vadd.xlane.f32.xlu0 %v687
    %v689 = vpop.xlane.xlu0 %688
    %v690 = vsel %vm311, %v686, 0.0
    %691 = vadd.xlane.f32.xlu0 %v690
    %v692 = vpop.xlane.xlu0 %691
    %v693 = vrcp.pop %v689
    %v694 = vrcp.pop %v692
    %v695 = vmul.f32 %v684, %v693
    %v696 = vmul.f32 %v686, %v694
    %v697 = vpack.c.bf16 %v696, %v695
    %698 = vrot.lane.b32.xlu0 %v229, 40
    %v699 = vpop.permute.xlu0 %698
    %v702 = vsel %vm311, %v697, 0
    %704 = vmatprep.subr.bf16.mxu0 0
    %705 = vmatpush1.bf16.msra.mxu0 0
    %706 = vmatprep.subr.bf16.mxu0 0
    %707 = vmatpush1.bf16.msra.mxu0 0
    %708 = vmatprep.subr.bf16.mxu0 0
    %709 = vmatpush1.bf16.msra.mxu0 0
    %710 = vmatprep.subr.bf16.mxu0 0
    %711 = vmatpush1.bf16.msra.mxu0 0
    %712 = vmatprep.subr.bf16.mxu0 0
    %713 = vmatpush1.bf16.msra.mxu0 0
    %714 = vmatprep.subr.bf16.mxu0 0
    %715 = vmatpush1.bf16.msra.mxu0 0
    %716 = vmatprep.subr.bf16.mxu0 0
    %717 = vmatpush1.bf16.msra.mxu0 0
    %718 = vmatprep.subr.bf16.mxu0 0
    %719 = vmatpush1.bf16.msra.mxu0 %v699
    %720 = vmatprep.subr.bf16.mxu0 0
    %721 = vmatpush2.bf16.msra.mxu0 0
    %722 = vmatprep.subr.bf16.mxu0 0
    %723 = vmatpush2.bf16.msra.mxu0 0
    %724 = vmatprep.subr.bf16.mxu0 0
    %725 = vmatpush2.bf16.msra.mxu0 0
    %726 = vmatprep.subr.bf16.mxu0 0
    %727 = vmatpush2.bf16.msra.mxu0 0
    %728 = vmatprep.subr.bf16.mxu0 0
    %729 = vmatpush2.bf16.msra.mxu0 0
    %730 = vmatprep.subr.bf16.mxu0 0
    %731 = vmatpush2.bf16.msra.mxu0 0
    %732 = vmatprep.subr.bf16.mxu0 0
    %733 = vmatpush2.bf16.msra.mxu0 0
    %734 = vmatprep.subr.bf16.mxu0 0
    %735 = vmatpush2.bf16.msra.mxu0 0
    %736 = vmatprep.mubr.bf16.mxu0 0
    %737 = vmatmul.mubr.bf16.gmra.mxu0 %v702
    %v738 = vpop.f32.mrf.mxu0
    %v739 = vadd.f32 0.0, %v738
    %v740 = vpop.f32.mrf.mxu0
    %v741 = vpop.f32.mrf.mxu0
    %v742 = vadd.f32 0.0, %v741
    %v743 = vpop.f32.mrf.mxu0
    %744 = vdwg.mxu0
    %747 = vrot.lane.b32.xlu0 %v497, 8
    %v748 = vpop.permute.xlu0 %747
    %749 = vrot.lane.b32.xlu0 %v500, 8
    %v750 = vpop.permute.xlu0 %749
    %755 = vrot.lane.b32.xlu0 %v618, 16
    %v756 = vpop.permute.xlu0 %755
    %757 = vrot.lane.b32.xlu0 %v621, 16
    %v758 = vpop.permute.xlu0 %757
    %763 = vrot.lane.b32.xlu0 %v739, 24
    %v764 = vpop.permute.xlu0 %763
    %765 = vrot.lane.b32.xlu0 %v742, 24
    %v766 = vpop.permute.xlu0 %765
    %v769 = vsel %vm263, %v376, %v748
    %v770 = vsel %vm263, %v379, %v750
    %v771 = vsel %vm311, %v769, %v756
    %v772 = vsel %vm311, %v770, %v758
    %vm773 = vcmask 195584
    %v774 = vsel %vm773, %v771, %v764
    %v775 = vsel %vm773, %v772, %v766
    %v776 = vpack.c.bf16 %v775, %v774
    %v777 = vld [vmem:[%s6] sm:$0xf]
    %v778 = vld [vmem:[%s6 + $0x4] sm:$0xf]
    %v779 = vld [vmem:[%s6 + $0x8] sm:$0xf]
    %v780 = vld [vmem:[%s6 + $0xc] sm:$0xf]
    %v781 = vld [vmem:[#allocation7] sm:$0x1]
    %v783 = vlaneseq
    %v784 = vshrl.u32 %v783, 7
    %v785 = vsub.s32 0, %v784
    %v786 = vrot.slane %v781, %v785
    %v792 = vunpack.c.l.b16 %v777
    %v793 = vunpack.c.l.b16 %v778
    %v794 = vunpack.c.l.b16 %v779
    %v795 = vunpack.c.l.b16 %v780
    %v796 = vpack.c.b16 %v793, %v792
    %v797 = vpack.c.b16 %v795, %v794
    %v801 = vsel %vm117, %v776, 0
    %803 = vmatprep.subr.bf16.mxu0 0
    %804 = vmatpush1.bf16.msra.mxu0 0
    %805 = vmatprep.subr.bf16.mxu0 0
    %806 = vmatpush1.bf16.msra.mxu0 0
    %807 = vmatprep.subr.bf16.mxu0 0
    %808 = vmatpush1.bf16.msra.mxu0 0
    %809 = vmatprep.subr.bf16.mxu0 0
    %810 = vmatpush1.bf16.msra.mxu0 0
    %811 = vmatprep.subr.bf16.mxu0 0
    %812 = vmatpush1.bf16.msra.mxu0 0
    %813 = vmatprep.subr.bf16.mxu0 0
    %814 = vmatpush1.bf16.msra.mxu0 0
    %815 = vmatprep.subr.bf16.mxu0 0
    %816 = vmatpush1.bf16.msra.mxu0 %v797
    %817 = vmatprep.subr.bf16.mxu0 0
    %818 = vmatpush1.bf16.msra.mxu0 %v796
    %819 = vmatprep.subr.bf16.mxu0 0
    %820 = vmatpush2.bf16.msra.mxu0 0
    %821 = vmatprep.subr.bf16.mxu0 0
    %822 = vmatpush2.bf16.msra.mxu0 0
    %823 = vmatprep.subr.bf16.mxu0 0
    %824 = vmatpush2.bf16.msra.mxu0 0
    %825 = vmatprep.subr.bf16.mxu0 0
    %826 = vmatpush2.bf16.msra.mxu0 0
    %827 = vmatprep.subr.bf16.mxu0 0
    %828 = vmatpush2.bf16.msra.mxu0 0
    %829 = vmatprep.subr.bf16.mxu0 0
    %830 = vmatpush2.bf16.msra.mxu0 0
    %831 = vmatprep.subr.bf16.mxu0 0
    %832 = vmatpush2.bf16.msra.mxu0 0
    %833 = vmatprep.subr.bf16.mxu0 0
    %834 = vmatpush2.bf16.msra.mxu0 0
    %835 = vmatprep.mubr.bf16.mxu0 0
    %836 = vmatmul.mubr.bf16.gmra.mxu0 %v801
    %v837 = vpop.f32.mrf.mxu0
    %v838 = vadd.f32 %v786, %v837
    %v839 = vpop.f32.mrf.mxu0
    %v840 = vpop.f32.mrf.mxu0
    %v841 = vadd.f32 %v786, %v840
    %v842 = vpop.f32.mrf.mxu0
    %843 = vdwg.mxu0
    %v844 = vadd.f32 %v113, %v838
    %v845 = vadd.f32 %v114, %v841
    %v846 = vld [vmem:[%s10] sm:$0x1]
    %v847 = vld [vmem:[%s11] sm:$0x1]
    %v848 = vsel %vm117, %v844, 0.0
    %849 = vadd.xlane.f32.xlu0 %v848
    %v850 = vpop.xlane.xlu0 %849
    %v851 = vsel %vm117, %v845, 0.0
    %852 = vadd.xlane.f32.xlu0 %v851
    %v853 = vpop.xlane.xlu0 %852
    %v854 = vmul.f32 %v850, %v124
    %v855 = vmul.f32 %v853, %v124
    %v856 = vsub.f32 %v844, %v854
    %v857 = vsub.f32 %v845, %v855
    %v858 = vmul.f32 %v856, %v856
    %v859 = vmul.f32 %v857, %v857
    %v860 = vsel %vm117, %v858, 0.0
    %861 = vadd.xlane.f32.xlu0 %v860
    %v862 = vpop.xlane.xlu0 %861
    %v863 = vsel %vm117, %v859, 0.0
    %864 = vadd.xlane.f32.xlu0 %v863
    %v865 = vpop.xlane.xlu0 %864
    %v866 = vmul.f32 %v862, %v124
    %v867 = vmul.f32 %v865, %v124
    %v868 = vadd.f32 %v866, 1e-05
    %v869 = vadd.f32 %v867, 1e-05
    %v870 = vrsqrt.pop %v868
    %v871 = vrsqrt.pop %v869
    %v872 = vmul.f32 %v856, %v870
    %v873 = vmul.f32 %v857, %v871
    %v875 = vlaneseq
    %v876 = vshrl.u32 %v875, 7
    %v877 = vsub.s32 0, %v876
    %v878 = vrot.slane %v846, %v877
    %v880 = vmul.f32 %v872, %v878
    %v881 = vmul.f32 %v873, %v878
    %v883 = vlaneseq
    %v884 = vshrl.u32 %v883, 7
    %v885 = vsub.s32 0, %v884
    %v886 = vrot.slane %v847, %v885
    %v888 = vadd.f32 %v880, %v886
    %v889 = vadd.f32 %v881, %v886
    %v890 = vpack.c.bf16 %v889, %v888
    %v891 = vld [vmem:[%s12] sm:$0xf]
    %v892 = vld [vmem:[%s12 + $0x4] sm:$0xf]
    %v893 = vld [vmem:[%s12 + $0x8] sm:$0xf]
    %v894 = vld [vmem:[%s12 + $0xc] sm:$0xf]
    %v895 = vld [vmem:[%s13] sm:$0x1]
    %v897 = vlaneseq
    %v898 = vshrl.u32 %v897, 7
    %v899 = vsub.s32 0, %v898
    %v900 = vrot.slane %v895, %v899
    %v906 = vunpack.c.l.b16 %v891
    %v907 = vunpack.c.l.b16 %v892
    %v908 = vunpack.c.l.b16 %v893
    %v909 = vunpack.c.l.b16 %v894
    %v910 = vpack.c.b16 %v907, %v906
    %v911 = vpack.c.b16 %v909, %v908
    %v915 = vsel %vm117, %v890, 0
    %917 = vmatprep.subr.bf16.mxu0 0
    %918 = vmatpush1.bf16.msra.mxu0 0
    %919 = vmatprep.subr.bf16.mxu0 0
    %920 = vmatpush1.bf16.msra.mxu0 0
    %921 = vmatprep.subr.bf16.mxu0 0
    %922 = vmatpush1.bf16.msra.mxu0 0
    %923 = vmatprep.subr.bf16.mxu0 0
    %924 = vmatpush1.bf16.msra.mxu0 0
    %925 = vmatprep.subr.bf16.mxu0 0
    %926 = vmatpush1.bf16.msra.mxu0 0
    %927 = vmatprep.subr.bf16.mxu0 0
    %928 = vmatpush1.bf16.msra.mxu0 0
    %929 = vmatprep.subr.bf16.mxu0 0
    %930 = vmatpush1.bf16.msra.mxu0 %v911
    %931 = vmatprep.subr.bf16.mxu0 0
    %932 = vmatpush1.bf16.msra.mxu0 %v910
    %933 = vmatprep.subr.bf16.mxu0 0
    %934 = vmatpush2.bf16.msra.mxu0 0
    %935 = vmatprep.subr.bf16.mxu0 0
    %936 = vmatpush2.bf16.msra.mxu0 0
    %937 = vmatprep.subr.bf16.mxu0 0
    %938 = vmatpush2.bf16.msra.mxu0 0
    %939 = vmatprep.subr.bf16.mxu0 0
    %940 = vmatpush2.bf16.msra.mxu0 0
    %941 = vmatprep.subr.bf16.mxu0 0
    %942 = vmatpush2.bf16.msra.mxu0 0
    %943 = vmatprep.subr.bf16.mxu0 0
    %944 = vmatpush2.bf16.msra.mxu0 0
    %945 = vmatprep.subr.bf16.mxu0 0
    %946 = vmatpush2.bf16.msra.mxu0 0
    %947 = vmatprep.subr.bf16.mxu0 0
    %948 = vmatpush2.bf16.msra.mxu0 0
    %949 = vmatprep.mubr.bf16.mxu0 0
    %950 = vmatmul.mubr.bf16.gmra.mxu0 %v915
    %v951 = vpop.f32.mrf.mxu0
    %v952 = vadd.f32 %v900, %v951
    %v953 = vpop.f32.mrf.mxu0
    %v954 = vpop.f32.mrf.mxu0
    %v955 = vadd.f32 %v900, %v954
    %v956 = vpop.f32.mrf.mxu0
    %957 = vdwg.mxu0
    %v958 = vmax.f32 %v952, 0.0
    %v959 = vmax.f32 %v955, 0.0
    %v960 = vpack.c.bf16 %v959, %v958
    %v961 = vld [vmem:[%s14] sm:$0xf]
    %v962 = vld [vmem:[%s14 + $0x4] sm:$0xf]
    %v963 = vld [vmem:[%s14 + $0x8] sm:$0xf]
    %v964 = vld [vmem:[%s14 + $0xc] sm:$0xf]
    %v965 = vld [vmem:[%s14 + $0x10] sm:$0xf]
    %v966 = vld [vmem:[%s14 + $0x14] sm:$0xf]
    %v967 = vld [vmem:[%s14 + $0x18] sm:$0xf]
    %v968 = vld [vmem:[%s14 + $0x1c] sm:$0xf]
    %v969 = vld [vmem:[%s15] sm:$0x1]
    %v971 = vlaneseq
    %v972 = vshrl.u32 %v971, 7
    %v973 = vsub.s32 0, %v972
    %v974 = vrot.slane %v969, %v973
    %v984 = vunpack.c.l.b16 %v961
    %v985 = vunpack.c.l.b16 %v962
    %v986 = vunpack.c.l.b16 %v963
    %v987 = vunpack.c.l.b16 %v964
    %v988 = vunpack.c.l.b16 %v965
    %v989 = vunpack.c.l.b16 %v966
    %v990 = vunpack.c.l.b16 %v967
    %v991 = vunpack.c.l.b16 %v968
    %v992 = vpack.c.b16 %v985, %v984
    %v993 = vpack.c.b16 %v987, %v986
    %v994 = vpack.c.b16 %v989, %v988
    %v995 = vpack.c.b16 %v991, %v990
    %vm1000 = vcmask 523264
    %v1002 = vsel %vm1000, %v960, 0
    %1004 = vmatprep.subr.bf16.mxu0 0
    %1005 = vmatpush1.bf16.msra.mxu0 0
    %1006 = vmatprep.subr.bf16.mxu0 0
    %1007 = vmatpush1.bf16.msra.mxu0 0
    %1008 = vmatprep.subr.bf16.mxu0 0
    %1009 = vmatpush1.bf16.msra.mxu0 0
    %1010 = vmatprep.subr.bf16.mxu0 0
    %1011 = vmatpush1.bf16.msra.mxu0 0
    %1012 = vmatprep.subr.bf16.mxu0 0
    %1013 = vmatpush1.bf16.msra.mxu0 %v995
    %1014 = vmatprep.subr.bf16.mxu0 0
    %1015 = vmatpush1.bf16.msra.mxu0 %v994
    %1016 = vmatprep.subr.bf16.mxu0 0
    %1017 = vmatpush1.bf16.msra.mxu0 %v993
    %1018 = vmatprep.subr.bf16.mxu0 0
    %1019 = vmatpush1.bf16.msra.mxu0 %v992
    %1020 = vmatprep.subr.bf16.mxu0 0
    %1021 = vmatpush2.bf16.msra.mxu0 0
    %1022 = vmatprep.subr.bf16.mxu0 0
    %1023 = vmatpush2.bf16.msra.mxu0 0
    %1024 = vmatprep.subr.bf16.mxu0 0
    %1025 = vmatpush2.bf16.msra.mxu0 0
    %1026 = vmatprep.subr.bf16.mxu0 0
    %1027 = vmatpush2.bf16.msra.mxu0 0
    %1028 = vmatprep.subr.bf16.mxu0 0
    %1029 = vmatpush2.bf16.msra.mxu0 0
    %1030 = vmatprep.subr.bf16.mxu0 0
    %1031 = vmatpush2.bf16.msra.mxu0 0
    %1032 = vmatprep.subr.bf16.mxu0 0
    %1033 = vmatpush2.bf16.msra.mxu0 0
    %1034 = vmatprep.subr.bf16.mxu0 0
    %1035 = vmatpush2.bf16.msra.mxu0 0
    %1036 = vmatprep.mubr.bf16.mxu0 0
    %1037 = vmatmul.mubr.bf16.gmra.mxu0 %v1002
    %v1038 = vpop.f32.mrf.mxu0
    %v1039 = vadd.f32 %v974, %v1038
    %v1040 = vpop.f32.mrf.mxu0
    %v1041 = vpop.f32.mrf.mxu0
    %v1042 = vadd.f32 %v974, %v1041
    %v1043 = vpop.f32.mrf.mxu0
    %1044 = vdwg.mxu0
    %v1045 = vadd.f32 %v844, %v1039
    %v1046 = vadd.f32 %v845, %v1042
    %1047 = vst.msk [vmem:[#allocation11] sm:$0xff] %vm117, %v1045
    %1048 = vst.msk [vmem:[#allocation11 + $0x8] sm:$0xff] %vm117, %v1046
    // Predicated region
    $region86: #{tpu_custom_call.1} parent=1 // pred_check
      _
    $region87: #{tpu_custom_call.1} parent=1 // pred_check_branch
      %1050 = sbr.rel (0) target = $region89
    $region88: #{tpu_custom_call.1} parent=1 // pred_region
      %s1052 = ssub.s32 256, 256
      %1053 = vsyncadd [#allocation4], %s1052
      %s1054 = sshll.u32 [#allocation11], 4
      %s1055 = int_to_ptr.vmem [resolvable:$true] %s1054
      %1060 = dma.vmem_to_hbm [thread:$0]  %s1055, 256, %s16, [#allocation4], 128, 128, 8
    $region89: #{tpu_custom_call.1} parent=1 // pred_fallthru
      _
    // Predicated region
    $region90: #{tpu_custom_call.1} parent=1 // pred_check
      _
    $region91: #{tpu_custom_call.1} parent=1 // pred_check_branch
      %1062 = sbr.rel (0) target = $region93
    $region92: #{tpu_custom_call.1} parent=1 // pred_region
      %1063 = dma.done [#allocation4], 256
    $region93: #{tpu_custom_call.1} parent=1 // pred_fallthru
      _
    %1064 = vsyncpa [#allocation3], 1
    %1065 = vsyncpa [#allocation6], 1
    %1066 = vsyncpa [#allocation9], 1
    %1067 = vsyncpa [#allocation4], 1

</llo_original>
